<compile_context>
chip_gen: v6e
topology: v6e:2x2x1
jax: 0.10.0
libtpu: 0.0.40
codegen_flags: <defaults>
</compile_context>

<pallas_src>
import jax
import jax.numpy as jnp
import numpy as np
from jax.experimental import pallas as pl
from jax.experimental.pallas import tpu as pltpu

# ---- model hyper-parameters (small, consistent with the module) ----
BATCH = 8
EMB_DIM = 128
HIDDEN_DIM = 128
N_LAYERS = 2
OUTPUT_DIM = 256  # vocab size (len(en_vocab) stand-in)

assert EMB_DIM == HIDDEN_DIM, "stacked per-layer gate weights assume E == H"


# --------------------------------------------------------------------------
# Single fused kernel: gather -> LSTM layer 0 -> LSTM layer 1 -> fc_out
# --------------------------------------------------------------------------
def _decoder_step_kernel(ids_ref, emb_ref, h_ref, c_ref, w_ref, b_ref,
                         fcw_ref, fcb_ref,
                         pred_ref, h_out_ref, c_out_ref):
    B = ids_ref.shape[0]
    V, _ = emb_ref.shape
    L, _, H = h_ref.shape

    # ---- embedding gather via one-hot matmul (vectorized, no per-row DMAs) ----
    ids = ids_ref[...]                                              # [B, 1] int32
    col = jax.lax.broadcasted_iota(jnp.int32, (B, V), 1)            # [B, V]
    onehot = jnp.where(col == ids, 1.0, 0.0).astype(emb_ref.dtype)  # [B, V] bf16
    # x is exactly the bf16 embedding rows, accumulated in f32.
    x = jnp.dot(onehot, emb_ref[...], preferred_element_type=jnp.float32)  # [B, E]
    # dropout: identity at inference time.

    # ---- two LSTM layers, intermediates stay in vregs ----
    for layer in range(L):
        h_prev = h_ref[layer]                                       # [B, H] f32
        c_prev = c_ref[layer]                                       # [B, H] f32
        # fused gate matmul: [x ; h] @ [[W_ih_t]; [W_hh_t]], K = E + H
        xh = jnp.concatenate([x, h_prev], axis=1).astype(w_ref.dtype)   # [B, E+H] bf16
        gates = (jnp.dot(xh, w_ref[layer], preferred_element_type=jnp.float32)
                 + b_ref[layer])                                     # [B, 4H] f32
        # PyTorch gate order: input, forget, cell(g), output — pointwise math in f32.
        i = jax.nn.sigmoid(gates[:, 0 * H:1 * H])
        f = jax.nn.sigmoid(gates[:, 1 * H:2 * H])
        g = jnp.tanh(gates[:, 2 * H:3 * H])
        o = jax.nn.sigmoid(gates[:, 3 * H:4 * H])
        c_new = f * c_prev + i * g
        h_new = o * jnp.tanh(c_new)
        h_out_ref[layer] = h_new
        c_out_ref[layer] = c_new
        x = h_new                                                   # input to next layer

    # ---- fc_out ----
    pred_ref[...] = (
        jnp.dot(x.astype(fcw_ref.dtype), fcw_ref[...],
                preferred_element_type=jnp.float32)
        + fcb_ref[...]
    )


@jax.jit
def decoder_forward(input_ids, hidden, cell, params):
    B = input_ids.shape[0]
    V = params["fc_b"].shape[-1]
    # clamp ids for robustness; one-hot gather also makes OOB ids harmless.
    ids2d = jnp.clip(input_ids.astype(jnp.int32), 0, V - 1).reshape(B, 1)

    in_specs = [pl.BlockSpec(memory_space=pltpu.MemorySpace.VMEM) for _ in range(8)]
    out_specs = (
        pl.BlockSpec(memory_space=pltpu.MemorySpace.VMEM),
        pl.BlockSpec(memory_space=pltpu.MemorySpace.VMEM),
        pl.BlockSpec(memory_space=pltpu.MemorySpace.VMEM),
    )

    pred, h_out, c_out = pl.pallas_call(
        _decoder_step_kernel,
        out_shape=(
            jax.ShapeDtypeStruct((B, V), jnp.float32),
            jax.ShapeDtypeStruct(hidden.shape, jnp.float32),
            jax.ShapeDtypeStruct(cell.shape, jnp.float32),
        ),
        in_specs=in_specs,
        out_specs=out_specs,
        # new hidden/cell state overwrites the old state buffers
        # (call args: ids2d=0, embedding=1, hidden=2, cell=3, ...)
        input_output_aliases={2: 1, 3: 2},
    )(ids2d, params["embedding"], hidden, cell,
      params["w_cat"], params["b"], params["fc_w_t"], params["fc_b"])
    return pred, h_out, c_out


# --------------------------------------------------------------------------
# Pure-JAX reference (accurate f32 math on the same bf16-stored weights)
# --------------------------------------------------------------------------
def decoder_forward_ref(input_ids, hidden, cell, params):
    V = params["fc_b"].shape[-1]
    H = HIDDEN_DIM
    ids = jnp.clip(input_ids.astype(jnp.int32), 0, V - 1)
    x = params["embedding"].astype(jnp.float32)[ids]
    new_h, new_c = [], []
    for layer in range(N_LAYERS):
        w = params["w_cat"][layer].astype(jnp.float32)
        xh = jnp.concatenate([x, hidden[layer]], axis=1)
        gates = jnp.dot(xh, w, precision=jax.lax.Precision.HIGHEST) + params["b"][layer]
        i = jax.nn.sigmoid(gates[:, 0 * H:1 * H])
        f = jax.nn.sigmoid(gates[:, 1 * H:2 * H])
        g = jnp.tanh(gates[:, 2 * H:3 * H])
        o = jax.nn.sigmoid(gates[:, 3 * H:4 * H])
        c_new = f * cell[layer] + i * g
        h_new = o * jnp.tanh(c_new)
        new_h.append(h_new)
        new_c.append(c_new)
        x = h_new
    pred = (jnp.dot(x, params["fc_w_t"].astype(jnp.float32),
                    precision=jax.lax.Precision.HIGHEST)
            + params["fc_b"])
    return pred, jnp.stack(new_h), jnp.stack(new_c)


# --------------------------------------------------------------------------
# Deterministic parameter init (shapes mirror nn.Embedding / nn.LSTM / nn.Linear)
# --------------------------------------------------------------------------
def init_params(key):
    ks = jax.random.split(key, 16)
    scale = 1.0 / np.sqrt(HIDDEN_DIM)

    embedding = jax.random.normal(ks[0], (OUTPUT_DIM, EMB_DIM), jnp.float32)

    w_layers, b_layers = [], []
    for layer in range(N_LAYERS):
        in_dim = EMB_DIM if layer == 0 else HIDDEN_DIM
        # PyTorch stores W_ih: [4H, in], W_hh: [4H, H]; we keep them transposed
        # and stacked so the kernel does a single [x ; h] @ W matmul per layer.
        w_ih_t = jax.random.uniform(
            ks[1 + 4 * layer], (in_dim, 4 * HIDDEN_DIM), jnp.float32, -scale, scale)
        w_hh_t = jax.random.uniform(
            ks[2 + 4 * layer], (HIDDEN_DIM, 4 * HIDDEN_DIM), jnp.float32, -scale, scale)
        b_ih = jax.random.uniform(
            ks[3 + 4 * layer], (4 * HIDDEN_DIM,), jnp.float32, -scale, scale)
        b_hh = jax.random.uniform(
            ks[4 + 4 * layer], (4 * HIDDEN_DIM,), jnp.float32, -scale, scale)
        w_layers.append(jnp.concatenate([w_ih_t, w_hh_t], axis=0))       # [E+H, 4H]
        b_layers.append((b_ih + b_hh).reshape(1, 4 * HIDDEN_DIM))

    fc_w_t = jax.random.uniform(
        ks[9], (HIDDEN_DIM, OUTPUT_DIM), jnp.float32, -scale, scale)
    fc_b = jax.random.uniform(
        ks[10], (1, OUTPUT_DIM), jnp.float32, -scale, scale)

    return {
        "embedding": embedding.astype(jnp.bfloat16),          # [V, E]    bf16
        "w_cat": jnp.stack(w_layers).astype(jnp.bfloat16),    # [L, E+H, 4H] bf16
        "b": jnp.stack(b_layers),                              # [L, 1, 4H]   f32
        "fc_w_t": fc_w_t.astype(jnp.bfloat16),                 # [H, V]    bf16
        "fc_b": fc_b,                                          # [1, V]    f32
    }


if __name__ == "__main__":
    key = jax.random.PRNGKey(0)
    k_param, k_ids, k_h, k_c = jax.random.split(key, 4)

    params = init_params(k_param)
    input_ids = jax.random.randint(k_ids, (BATCH,), 0, OUTPUT_DIM, jnp.int32)
    hidden = jax.random.normal(k_h, (N_LAYERS, BATCH, HIDDEN_DIM), jnp.float32)
    cell = jax.random.normal(k_c, (N_LAYERS, BATCH, HIDDEN_DIM), jnp.float32)

    pred, h_out, c_out = decoder_forward(input_ids, hidden, cell, params)
    jax.block_until_ready((pred, h_out, c_out))

    # sanity check against a pure-JAX reference (bf16 weights, f32 math)
    pred_r, h_r, c_r = decoder_forward_ref(input_ids, hidden, cell, params)
    assert pred.shape == (BATCH, OUTPUT_DIM)
    assert h_out.shape == (N_LAYERS, BATCH, HIDDEN_DIM)
    assert c_out.shape == (N_LAYERS, BATCH, HIDDEN_DIM)
    np.testing.assert_allclose(np.asarray(pred), np.asarray(pred_r), rtol=3e-2, atol=3e-2)
    np.testing.assert_allclose(np.asarray(h_out), np.asarray(h_r), rtol=3e-2, atol=3e-2)
    np.testing.assert_allclose(np.asarray(c_out), np.asarray(c_r), rtol=3e-2, atol=3e-2)

    print("KERNEL_OK")
</pallas_src>

<mosaic_0001>
module attributes {stable_mosaic.version = 11 : i64} {
  func.func @_decoder_step_kernel(%arg0: memref<8x1xi32, #tpu.memory_space<vmem>>, %arg1: memref<256x128xbf16, #tpu.memory_space<vmem>>, %arg2: memref<2x8x128xf32, #tpu.memory_space<vmem>>, %arg3: memref<2x8x128xf32, #tpu.memory_space<vmem>>, %arg4: memref<2x256x512xbf16, #tpu.memory_space<vmem>>, %arg5: memref<2x1x512xf32, #tpu.memory_space<vmem>>, %arg6: memref<128x256xbf16, #tpu.memory_space<vmem>>, %arg7: memref<1x256xf32, #tpu.memory_space<vmem>>, %arg8: memref<8x256xf32, #tpu.memory_space<vmem>>, %arg9: memref<2x8x128xf32, #tpu.memory_space<vmem>>, %arg10: memref<2x8x128xf32, #tpu.memory_space<vmem>>) attributes {dimension_semantics = [], scalar_prefetch = 0 : i64, scratch_operands = 0 : i64, tpu.core_type = #tpu.core_type<tc>} {
    %c0 = arith.constant 0 : index
    %c0_0 = arith.constant 0 : index
    %0 = vector.load %arg0[%c0, %c0_0] : memref<8x1xi32, #tpu.memory_space<vmem>>, vector<8x1xi32>
    %1 = tpu.iota {dimensions = array<i32: 1>} : vector<8x256xi32>
    %2 = vector.broadcast %0 : vector<8x1xi32> to vector<8x256xi32>
    %3 = arith.cmpi eq, %1, %2 : vector<8x256xi32>
    %cst = arith.constant 1.000000e+00 : f32
    %cst_1 = arith.constant 0.000000e+00 : f32
    %4 = vector.broadcast %cst : f32 to vector<8x256xf32>
    %5 = vector.broadcast %cst_1 : f32 to vector<8x256xf32>
    %6 = arith.select %3, %4, %5 : vector<8x256xi1>, vector<8x256xf32>
    %7 = arith.truncf %6 : vector<8x256xf32> to vector<8x256xbf16>
    %c0_2 = arith.constant 0 : index
    %c0_3 = arith.constant 0 : index
    %8 = vector.load %arg1[%c0_2, %c0_3] : memref<256x128xbf16, #tpu.memory_space<vmem>>, vector<256x128xbf16>
    %cst_4 = arith.constant dense<0.000000e+00> : vector<8x128xf32>
    %9 = tpu.matmul %7, %8, %cst_4 {dimension_numbers = #tpu.dot_dimension_numbers<[1], [0], [0], [1], [0, 0, 1, 1], [], []>} : vector<8x256xbf16>, vector<256x128xbf16>, vector<8x128xf32> -> vector<8x128xf32>
    %c0_5 = arith.constant 0 : index
    %c0_6 = arith.constant 0 : index
    %c0_7 = arith.constant 0 : index
    %10 = vector.load %arg2[%c0_5, %c0_6, %c0_7] : memref<2x8x128xf32, #tpu.memory_space<vmem>>, vector<1x8x128xf32>
    %11 = vector.shape_cast %10 : vector<1x8x128xf32> to vector<8x128xf32>
    %c0_8 = arith.constant 0 : index
    %c0_9 = arith.constant 0 : index
    %c0_10 = arith.constant 0 : index
    %12 = vector.load %arg3[%c0_8, %c0_9, %c0_10] : memref<2x8x128xf32, #tpu.memory_space<vmem>>, vector<1x8x128xf32>
    %13 = vector.shape_cast %12 : vector<1x8x128xf32> to vector<8x128xf32>
    %14 = tpu.concatenate %9, %11 in 1 : vector<8x128xf32>, vector<8x128xf32> -> vector<8x256xf32>
    %15 = arith.truncf %14 : vector<8x256xf32> to vector<8x256xbf16>
    %c0_11 = arith.constant 0 : index
    %c0_12 = arith.constant 0 : index
    %c0_13 = arith.constant 0 : index
    %16 = vector.load %arg4[%c0_11, %c0_12, %c0_13] : memref<2x256x512xbf16, #tpu.memory_space<vmem>>, vector<1x256x512xbf16>
    %17 = vector.shape_cast %16 : vector<1x256x512xbf16> to vector<256x512xbf16>
    %cst_14 = arith.constant dense<0.000000e+00> : vector<8x512xf32>
    %18 = tpu.matmul %15, %17, %cst_14 {dimension_numbers = #tpu.dot_dimension_numbers<[1], [0], [0], [1], [0, 0, 1, 1], [], []>} : vector<8x256xbf16>, vector<256x512xbf16>, vector<8x512xf32> -> vector<8x512xf32>
    %c0_15 = arith.constant 0 : index
    %c0_16 = arith.constant 0 : index
    %c0_17 = arith.constant 0 : index
    %19 = vector.load %arg5[%c0_15, %c0_16, %c0_17] : memref<2x1x512xf32, #tpu.memory_space<vmem>>, vector<1x1x512xf32>
    %20 = vector.shape_cast %19 : vector<1x1x512xf32> to vector<1x512xf32>
    %21 = vector.broadcast %20 : vector<1x512xf32> to vector<8x512xf32>
    %22 = arith.addf %18, %21 : vector<8x512xf32>
    %23 = vector.extract_strided_slice %22 {offsets = [0, 0], sizes = [8, 128], strides = [1, 1]} : vector<8x512xf32> to vector<8x128xf32>
    %24 = arith.negf %23 : vector<8x128xf32>
    %25 = math.exp %24 : vector<8x128xf32>
    %cst_18 = arith.constant 1.000000e+00 : f32
    %26 = vector.broadcast %cst_18 : f32 to vector<8x128xf32>
    %27 = arith.addf %26, %25 : vector<8x128xf32>
    %28 = arith.divf %26, %27 : vector<8x128xf32>
    %29 = vector.extract_strided_slice %22 {offsets = [0, 128], sizes = [8, 128], strides = [1, 1]} : vector<8x512xf32> to vector<8x128xf32>
    %30 = arith.negf %29 : vector<8x128xf32>
    %31 = math.exp %30 : vector<8x128xf32>
    %cst_19 = arith.constant 1.000000e+00 : f32
    %32 = vector.broadcast %cst_19 : f32 to vector<8x128xf32>
    %33 = arith.addf %32, %31 : vector<8x128xf32>
    %34 = arith.divf %32, %33 : vector<8x128xf32>
    %35 = vector.extract_strided_slice %22 {offsets = [0, 256], sizes = [8, 128], strides = [1, 1]} : vector<8x512xf32> to vector<8x128xf32>
    %36 = math.tanh %35 : vector<8x128xf32>
    %37 = vector.extract_strided_slice %22 {offsets = [0, 384], sizes = [8, 128], strides = [1, 1]} : vector<8x512xf32> to vector<8x128xf32>
    %38 = arith.negf %37 : vector<8x128xf32>
    %39 = math.exp %38 : vector<8x128xf32>
    %cst_20 = arith.constant 1.000000e+00 : f32
    %40 = vector.broadcast %cst_20 : f32 to vector<8x128xf32>
    %41 = arith.addf %40, %39 : vector<8x128xf32>
    %42 = arith.divf %40, %41 : vector<8x128xf32>
    %43 = arith.mulf %34, %13 : vector<8x128xf32>
    %44 = arith.mulf %28, %36 : vector<8x128xf32>
    %45 = arith.addf %43, %44 : vector<8x128xf32>
    %46 = math.tanh %45 : vector<8x128xf32>
    %47 = arith.mulf %42, %46 : vector<8x128xf32>
    %c0_21 = arith.constant 0 : index
    %c0_22 = arith.constant 0 : index
    %c0_23 = arith.constant 0 : index
    %48 = vector.load %arg9[%c0_21, %c0_22, %c0_23] : memref<2x8x128xf32, #tpu.memory_space<vmem>>, vector<1x8x128xf32>
    %49 = vector.shape_cast %48 : vector<1x8x128xf32> to vector<8x128xf32>
    %50 = vector.shape_cast %47 : vector<8x128xf32> to vector<1x8x128xf32>
    tpu.vector_store %arg9[%c0_21, %c0_22, %c0_23], %50 {strides = array<i32>} : memref<2x8x128xf32, #tpu.memory_space<vmem>>, vector<1x8x128xf32>,
    %c0_24 = arith.constant 0 : index
    %c0_25 = arith.constant 0 : index
    %c0_26 = arith.constant 0 : index
    %51 = vector.load %arg10[%c0_24, %c0_25, %c0_26] : memref<2x8x128xf32, #tpu.memory_space<vmem>>, vector<1x8x128xf32>
    %52 = vector.shape_cast %51 : vector<1x8x128xf32> to vector<8x128xf32>
    %53 = vector.shape_cast %45 : vector<8x128xf32> to vector<1x8x128xf32>
    tpu.vector_store %arg10[%c0_24, %c0_25, %c0_26], %53 {strides = array<i32>} : memref<2x8x128xf32, #tpu.memory_space<vmem>>, vector<1x8x128xf32>,
    %c1 = arith.constant 1 : index
    %c0_27 = arith.constant 0 : index
    %c0_28 = arith.constant 0 : index
    %54 = vector.load %arg2[%c1, %c0_27, %c0_28] : memref<2x8x128xf32, #tpu.memory_space<vmem>>, vector<1x8x128xf32>
    %55 = vector.shape_cast %54 : vector<1x8x128xf32> to vector<8x128xf32>
    %c1_29 = arith.constant 1 : index
    %c0_30 = arith.constant 0 : index
    %c0_31 = arith.constant 0 : index
    %56 = vector.load %arg3[%c1_29, %c0_30, %c0_31] : memref<2x8x128xf32, #tpu.memory_space<vmem>>, vector<1x8x128xf32>
    %57 = vector.shape_cast %56 : vector<1x8x128xf32> to vector<8x128xf32>
    %58 = tpu.concatenate %47, %55 in 1 : vector<8x128xf32>, vector<8x128xf32> -> vector<8x256xf32>
    %59 = arith.truncf %58 : vector<8x256xf32> to vector<8x256xbf16>
    %c1_32 = arith.constant 1 : index
    %c0_33 = arith.constant 0 : index
    %c0_34 = arith.constant 0 : index
    %60 = vector.load %arg4[%c1_32, %c0_33, %c0_34] : memref<2x256x512xbf16, #tpu.memory_space<vmem>>, vector<1x256x512xbf16>
    %61 = vector.shape_cast %60 : vector<1x256x512xbf16> to vector<256x512xbf16>
    %cst_35 = arith.constant dense<0.000000e+00> : vector<8x512xf32>
    %62 = tpu.matmul %59, %61, %cst_35 {dimension_numbers = #tpu.dot_dimension_numbers<[1], [0], [0], [1], [0, 0, 1, 1], [], []>} : vector<8x256xbf16>, vector<256x512xbf16>, vector<8x512xf32> -> vector<8x512xf32>
    %c1_36 = arith.constant 1 : index
    %c0_37 = arith.constant 0 : index
    %c0_38 = arith.constant 0 : index
    %63 = vector.load %arg5[%c1_36, %c0_37, %c0_38] : memref<2x1x512xf32, #tpu.memory_space<vmem>>, vector<1x1x512xf32>
    %64 = vector.shape_cast %63 : vector<1x1x512xf32> to vector<1x512xf32>
    %65 = vector.broadcast %64 : vector<1x512xf32> to vector<8x512xf32>
    %66 = arith.addf %62, %65 : vector<8x512xf32>
    %67 = vector.extract_strided_slice %66 {offsets = [0, 0], sizes = [8, 128], strides = [1, 1]} : vector<8x512xf32> to vector<8x128xf32>
    %68 = arith.negf %67 : vector<8x128xf32>
    %69 = math.exp %68 : vector<8x128xf32>
    %cst_39 = arith.constant 1.000000e+00 : f32
    %70 = vector.broadcast %cst_39 : f32 to vector<8x128xf32>
    %71 = arith.addf %70, %69 : vector<8x128xf32>
    %72 = arith.divf %70, %71 : vector<8x128xf32>
    %73 = vector.extract_strided_slice %66 {offsets = [0, 128], sizes = [8, 128], strides = [1, 1]} : vector<8x512xf32> to vector<8x128xf32>
    %74 = arith.negf %73 : vector<8x128xf32>
    %75 = math.exp %74 : vector<8x128xf32>
    %cst_40 = arith.constant 1.000000e+00 : f32
    %76 = vector.broadcast %cst_40 : f32 to vector<8x128xf32>
    %77 = arith.addf %76, %75 : vector<8x128xf32>
    %78 = arith.divf %76, %77 : vector<8x128xf32>
    %79 = vector.extract_strided_slice %66 {offsets = [0, 256], sizes = [8, 128], strides = [1, 1]} : vector<8x512xf32> to vector<8x128xf32>
    %80 = math.tanh %79 : vector<8x128xf32>
    %81 = vector.extract_strided_slice %66 {offsets = [0, 384], sizes = [8, 128], strides = [1, 1]} : vector<8x512xf32> to vector<8x128xf32>
    %82 = arith.negf %81 : vector<8x128xf32>
    %83 = math.exp %82 : vector<8x128xf32>
    %cst_41 = arith.constant 1.000000e+00 : f32
    %84 = vector.broadcast %cst_41 : f32 to vector<8x128xf32>
    %85 = arith.addf %84, %83 : vector<8x128xf32>
    %86 = arith.divf %84, %85 : vector<8x128xf32>
    %87 = arith.mulf %78, %57 : vector<8x128xf32>
    %88 = arith.mulf %72, %80 : vector<8x128xf32>
    %89 = arith.addf %87, %88 : vector<8x128xf32>
    %90 = math.tanh %89 : vector<8x128xf32>
    %91 = arith.mulf %86, %90 : vector<8x128xf32>
    %c1_42 = arith.constant 1 : index
    %c0_43 = arith.constant 0 : index
    %c0_44 = arith.constant 0 : index
    %92 = vector.load %arg9[%c1_42, %c0_43, %c0_44] : memref<2x8x128xf32, #tpu.memory_space<vmem>>, vector<1x8x128xf32>
    %93 = vector.shape_cast %92 : vector<1x8x128xf32> to vector<8x128xf32>
    %94 = vector.shape_cast %91 : vector<8x128xf32> to vector<1x8x128xf32>
    tpu.vector_store %arg9[%c1_42, %c0_43, %c0_44], %94 {strides = array<i32>} : memref<2x8x128xf32, #tpu.memory_space<vmem>>, vector<1x8x128xf32>,
    %c1_45 = arith.constant 1 : index
    %c0_46 = arith.constant 0 : index
    %c0_47 = arith.constant 0 : index
    %95 = vector.load %arg10[%c1_45, %c0_46, %c0_47] : memref<2x8x128xf32, #tpu.memory_space<vmem>>, vector<1x8x128xf32>
    %96 = vector.shape_cast %95 : vector<1x8x128xf32> to vector<8x128xf32>
    %97 = vector.shape_cast %89 : vector<8x128xf32> to vector<1x8x128xf32>
    tpu.vector_store %arg10[%c1_45, %c0_46, %c0_47], %97 {strides = array<i32>} : memref<2x8x128xf32, #tpu.memory_space<vmem>>, vector<1x8x128xf32>,
    %98 = arith.truncf %91 : vector<8x128xf32> to vector<8x128xbf16>
    %c0_48 = arith.constant 0 : index
    %c0_49 = arith.constant 0 : index
    %99 = vector.load %arg6[%c0_48, %c0_49] : memref<128x256xbf16, #tpu.memory_space<vmem>>, vector<128x256xbf16>
    %cst_50 = arith.constant dense<0.000000e+00> : vector<8x256xf32>
    %100 = tpu.matmul %98, %99, %cst_50 {dimension_numbers = #tpu.dot_dimension_numbers<[1], [0], [0], [1], [0, 0, 1, 1], [], []>} : vector<8x128xbf16>, vector<128x256xbf16>, vector<8x256xf32> -> vector<8x256xf32>
    %c0_51 = arith.constant 0 : index
    %c0_52 = arith.constant 0 : index
    %101 = vector.load %arg7[%c0_51, %c0_52] : memref<1x256xf32, #tpu.memory_space<vmem>>, vector<1x256xf32>
    %102 = vector.broadcast %101 : vector<1x256xf32> to vector<8x256xf32>
    %103 = arith.addf %100, %102 : vector<8x256xf32>
    %c0_53 = arith.constant 0 : index
    %c0_54 = arith.constant 0 : index
    %104 = vector.load %arg8[%c0_53, %c0_54] : memref<8x256xf32, #tpu.memory_space<vmem>>, vector<8x256xf32>
    tpu.vector_store %arg8[%c0_53, %c0_54], %103 {strides = array<i32>} : memref<8x256xf32, #tpu.memory_space<vmem>>, vector<8x256xf32>,
    return
  }
}

</mosaic_0001>

<llo_original>
// kernel: decoder_forward.1
$region0: #{decoder_forward.1}
  #allocation0 [shape = 'u32[]', space=smem, size = 0x4, offset = 0x4, fixed_abs, tag = 'smem constant byte address 0x4 - core index']
  #allocation1 [shape = 'u32[144,128]{1,0:T(1,128)}', space=vmem, size = 0x12000, scoped, tag = 'internal scratch']
  %s0 = inlined_call_operand.vmem [shape: s32[8,1], index: 0, kind: input, shape index: {}]
  %s1 = inlined_call_operand.hbm [shape: bf16[256,128], index: 1, kind: input, shape index: {}]
  %s2 = inlined_call_operand.hbm [shape: f32[2,8,128], index: 2, kind: input, shape index: {}, may-alias: {2,9}]
  %s3 = inlined_call_operand.hbm [shape: f32[2,8,128], index: 3, kind: input, shape index: {}, may-alias: {3,10}]
  %s4 = inlined_call_operand.hbm [shape: bf16[2,256,512], index: 4, kind: input, shape index: {}]
  %s5 = inlined_call_operand.vmem [shape: f32[2,1,512], index: 5, kind: input, shape index: {}]
  %s6 = inlined_call_operand.hbm [shape: bf16[128,256], index: 6, kind: input, shape index: {}]
  %s7 = inlined_call_operand.vmem [shape: f32[1,256], index: 7, kind: input, shape index: {}]
  %s8 = inlined_call_operand.hbm [shape: f32[8,256], index: 8, kind: output, shape index: {0}]
  %s9 = inlined_call_operand.hbm [shape: f32[2,8,128], index: 9, kind: output, shape index: {1}, may-alias: {2,9}]
  %s10 = inlined_call_operand.hbm [shape: f32[2,8,128], index: 10, kind: output, shape index: {2}, may-alias: {3,10}]
  %11 = xla_tuple %s8, %s9, %s10
  %s12 = sld [smem:[#allocation0]]
  $region78: #{decoder_forward.1} parent=0
    _
  %s14 = ssub.s32 1, %s12
  %s15 = scalar_select 0, %s14, %s12
  $region1: #{decoder_forward.1} parent=0
    #allocation2 [shape = 'u8[65536]{0}', space=vmem, size = 0x10000, scoped, tag = 'input window, operand 1, single buffered']
    #allocation3 [shape = 's32[1]{0}', space=sflag, size = 0x4, scoped, tag = 'scoped memory for decoder_forward.1']
    #allocation4 [shape = 's32[1]{0}', space=sflag, size = 0x4, scoped, tag = 'scoped memory for decoder_forward.1']
    #allocation5 [shape = 'u8[8192]{0}', space=vmem, size = 0x2000, scoped, tag = 'input window, operand 2, single buffered']
    #allocation6 [shape = 's32[1]{0}', space=sflag, size = 0x4, scoped, tag = 'scoped memory for decoder_forward.1']
    #allocation7 [shape = 'u8[8192]{0}', space=vmem, size = 0x2000, scoped, tag = 'input window, operand 3, single buffered']
    #allocation8 [shape = 'u8[524288]{0}', space=vmem, size = 0x80000, scoped, tag = 'input window, operand 4, single buffered']
    #allocation9 [shape = 's32[1]{0}', space=sflag, size = 0x4, scoped, tag = 'scoped memory for decoder_forward.1']
    #allocation10 [shape = 'u8[65536]{0}', space=vmem, size = 0x10000, scoped, tag = 'input window, operand 6, single buffered']
    #allocation11 [shape = 'u8[8192]{0}', space=vmem, size = 0x2000, scoped, tag = 'output window, operand 0, single buffered']
    #allocation12 [shape = 'u8[8192]{0}', space=vmem, size = 0x2000, scoped, tag = 'output window, operand 1, single buffered']
    #allocation13 [shape = 's32[1]{0}', space=sflag, size = 0x4, scoped, tag = 'scoped memory for decoder_forward.1']
    #allocation14 [shape = 'u8[8192]{0}', space=vmem, size = 0x2000, scoped, tag = 'output window, operand 2, single buffered']
    %16 = vsyncpa [#allocation3], 0
    %17 = vsyncpa [#allocation6], 0
    %18 = vsyncpa [#allocation9], 0
    %19 = vsyncpa [#allocation4], 0
    %20 = vsyncpa [#allocation13], 0
    // Predicated region
    $region2: #{decoder_forward.1} parent=1 // pred_check
      _
    $region3: #{decoder_forward.1} parent=1 // pred_check_branch
      %22 = sbr.rel (0) target = $region5
    $region4: #{decoder_forward.1} parent=1 // pred_region
      _
    $region5: #{decoder_forward.1} parent=1 // pred_fallthru
      _
    // Predicated region
    $region6: #{decoder_forward.1} parent=1 // pred_check
      _
    $region7: #{decoder_forward.1} parent=1 // pred_check_branch
      %24 = sbr.rel (0) target = $region9
    $region8: #{decoder_forward.1} parent=1 // pred_region
      %s26 = ssub.s32 2048, 2048
      %27 = vsyncadd [#allocation3], %s26
      %s28 = sshll.u32 [#allocation2], 4
      %s29 = int_to_ptr.vmem [resolvable:$true] %s28
      %34 = dma.hbm_to_vmem [thread:$0]  %s1, 2048, %s29, [#allocation3], 64, 64, 4
    $region9: #{decoder_forward.1} parent=1 // pred_fallthru
      _
    // Predicated region
    $region10: #{decoder_forward.1} parent=1 // pred_check
      _
    $region11: #{decoder_forward.1} parent=1 // pred_check_branch
      %36 = sbr.rel (0) target = $region13
    $region12: #{decoder_forward.1} parent=1 // pred_region
      %s38 = ssub.s32 256, 256
      %39 = vsyncadd [#allocation6], %s38
      %s40 = sshll.u32 [#allocation5], 4
      %s41 = int_to_ptr.vmem [resolvable:$true] %s40
      %46 = dma.hbm_to_vmem [thread:$0]  %s2, 256, %s41, [#allocation6], 128, 128, 8
    $region13: #{decoder_forward.1} parent=1 // pred_fallthru
      _
    // Predicated region
    $region14: #{decoder_forward.1} parent=1 // pred_check
      _
    $region15: #{decoder_forward.1} parent=1 // pred_check_branch
      %48 = sbr.rel (0) target = $region17
    $region16: #{decoder_forward.1} parent=1 // pred_region
      %s50 = ssub.s32 256, 256
      %51 = vsyncadd [#allocation6], %s50
      %s52 = sshll.u32 [#allocation7], 4
      %s53 = int_to_ptr.vmem [resolvable:$true] %s52
      %58 = dma.hbm_to_vmem [thread:$0]  %s3, 256, %s53, [#allocation6], 128, 128, 8
    $region17: #{decoder_forward.1} parent=1 // pred_fallthru
      _
    // Predicated region
    $region18: #{decoder_forward.1} parent=1 // pred_check
      _
    $region19: #{decoder_forward.1} parent=1 // pred_check_branch
      %60 = sbr.rel (0) target = $region21
    $region20: #{decoder_forward.1} parent=1 // pred_region
      %s62 = ssub.s32 16384, 16384
      %63 = vsyncadd [#allocation9], %s62
      %s64 = sshll.u32 [#allocation8], 4
      %s65 = int_to_ptr.vmem [resolvable:$true] %s64
      %70 = dma.hbm_to_vmem [thread:$0]  %s4, 16384, %s65, [#allocation9], 256, 256, 16
    $region21: #{decoder_forward.1} parent=1 // pred_fallthru
      _
    // Predicated region
    $region22: #{decoder_forward.1} parent=1 // pred_check
      _
    $region23: #{decoder_forward.1} parent=1 // pred_check_branch
      %72 = sbr.rel (0) target = $region25
    $region24: #{decoder_forward.1} parent=1 // pred_region
      _
    $region25: #{decoder_forward.1} parent=1 // pred_fallthru
      _
    // Predicated region
    $region26: #{decoder_forward.1} parent=1 // pred_check
      _
    $region27: #{decoder_forward.1} parent=1 // pred_check_branch
      %74 = sbr.rel (0) target = $region29
    $region28: #{decoder_forward.1} parent=1 // pred_region
      %s76 = ssub.s32 2048, 2048
      %77 = vsyncadd [#allocation9], %s76
      %s78 = sshll.u32 [#allocation10], 4
      %s79 = int_to_ptr.vmem [resolvable:$true] %s78
      %84 = dma.hbm_to_vmem [thread:$0]  %s6, 2048, %s79, [#allocation9], 128, 128, 8
    $region29: #{decoder_forward.1} parent=1 // pred_fallthru
      _
    // Predicated region
    $region30: #{decoder_forward.1} parent=1 // pred_check
      _
    $region31: #{decoder_forward.1} parent=1 // pred_check_branch
      %86 = sbr.rel (0) target = $region33
    $region32: #{decoder_forward.1} parent=1 // pred_region
      _
    $region33: #{decoder_forward.1} parent=1 // pred_fallthru
      _
    // Predicated region
    $region34: #{decoder_forward.1} parent=1 // pred_check
      _
    $region35: #{decoder_forward.1} parent=1 // pred_check_branch
      %88 = sbr.rel (0) target = $region37
    $region36: #{decoder_forward.1} parent=1 // pred_region
      %89 = dma.done [#allocation3], 2048
    $region37: #{decoder_forward.1} parent=1 // pred_fallthru
      _
    // Predicated region
    $region38: #{decoder_forward.1} parent=1 // pred_check
      _
    $region39: #{decoder_forward.1} parent=1 // pred_check_branch
      %91 = sbr.rel (0) target = $region41
    $region40: #{decoder_forward.1} parent=1 // pred_region
      %92 = dma.done [#allocation6], 256
    $region41: #{decoder_forward.1} parent=1 // pred_fallthru
      _
    // Predicated region
    $region42: #{decoder_forward.1} parent=1 // pred_check
      _
    $region43: #{decoder_forward.1} parent=1 // pred_check_branch
      %94 = sbr.rel (0) target = $region45
    $region44: #{decoder_forward.1} parent=1 // pred_region
      %95 = dma.done [#allocation6], 256
    $region45: #{decoder_forward.1} parent=1 // pred_fallthru
      _
    // Predicated region
    $region46: #{decoder_forward.1} parent=1 // pred_check
      _
    $region47: #{decoder_forward.1} parent=1 // pred_check_branch
      %97 = sbr.rel (0) target = $region49
    $region48: #{decoder_forward.1} parent=1 // pred_region
      %98 = dma.done [#allocation9], 16384
    $region49: #{decoder_forward.1} parent=1 // pred_fallthru
      _
    // Predicated region
    $region50: #{decoder_forward.1} parent=1 // pred_check
      _
    $region51: #{decoder_forward.1} parent=1 // pred_check_branch
      %100 = sbr.rel (0) target = $region53
    $region52: #{decoder_forward.1} parent=1 // pred_region
      %101 = dma.done [#allocation9], 2048
    $region53: #{decoder_forward.1} parent=1 // pred_fallthru
      _
    %v103 = vld [vmem:[%s0] sm:$0xff]
    %v104 = vlaneseq
    %v105 = vand.u32 %v104, 127
    %v106 = vadd.s32 %v105, 128
    %107 = vset.pattern.permute.xlu0 0
    %108 = vperm.xlu0 %107, %v103
    %v109 = vpop.permute.xlu0 %108
    %vm110 = vcmp.eq.s32.totalorder %v105, %v109
    %vm111 = vcmp.eq.s32.totalorder %v106, %v109
    %v112 = vsel %vm110, 1.0, 0.0
    %v113 = vsel %vm111, 1.0, 0.0
    %v114 = vpack.c.bf16 %v112, %v112
    %v115 = vpack.c.bf16 %v113, %v113
    %v116 = vld [vmem:[#allocation2] sm:$0xf]
    %v117 = vld [vmem:[#allocation2 + $0x4] sm:$0xf]
    %v118 = vld [vmem:[#allocation2 + $0x8] sm:$0xf]
    %v119 = vld [vmem:[#allocation2 + $0xc] sm:$0xf]
    %v120 = vld [vmem:[#allocation2 + $0x10] sm:$0xf]
    %v121 = vld [vmem:[#allocation2 + $0x14] sm:$0xf]
    %v122 = vld [vmem:[#allocation2 + $0x18] sm:$0xf]
    %v123 = vld [vmem:[#allocation2 + $0x1c] sm:$0xf]
    %v124 = vld [vmem:[#allocation2 + $0x20] sm:$0xf]
    %v125 = vld [vmem:[#allocation2 + $0x24] sm:$0xf]
    %v126 = vld [vmem:[#allocation2 + $0x28] sm:$0xf]
    %v127 = vld [vmem:[#allocation2 + $0x2c] sm:$0xf]
    %v128 = vld [vmem:[#allocation2 + $0x30] sm:$0xf]
    %v129 = vld [vmem:[#allocation2 + $0x34] sm:$0xf]
    %v130 = vld [vmem:[#allocation2 + $0x38] sm:$0xf]
    %v131 = vld [vmem:[#allocation2 + $0x3c] sm:$0xf]
    %v132 = vld [vmem:[#allocation2 + $0x40] sm:$0xf]
    %v133 = vld [vmem:[#allocation2 + $0x44] sm:$0xf]
    %v134 = vld [vmem:[#allocation2 + $0x48] sm:$0xf]
    %v135 = vld [vmem:[#allocation2 + $0x4c] sm:$0xf]
    %v136 = vld [vmem:[#allocation2 + $0x50] sm:$0xf]
    %v137 = vld [vmem:[#allocation2 + $0x54] sm:$0xf]
    %v138 = vld [vmem:[#allocation2 + $0x58] sm:$0xf]
    %v139 = vld [vmem:[#allocation2 + $0x5c] sm:$0xf]
    %v140 = vld [vmem:[#allocation2 + $0x60] sm:$0xf]
    %v141 = vld [vmem:[#allocation2 + $0x64] sm:$0xf]
    %v142 = vld [vmem:[#allocation2 + $0x68] sm:$0xf]
    %v143 = vld [vmem:[#allocation2 + $0x6c] sm:$0xf]
    %v144 = vld [vmem:[#allocation2 + $0x70] sm:$0xf]
    %v145 = vld [vmem:[#allocation2 + $0x74] sm:$0xf]
    %v146 = vld [vmem:[#allocation2 + $0x78] sm:$0xf]
    %v147 = vld [vmem:[#allocation2 + $0x7c] sm:$0xf]
    %v180 = vunpack.c.l.b16 %v116
    %v181 = vunpack.c.l.b16 %v117
    %v182 = vunpack.c.l.b16 %v118
    %v183 = vunpack.c.l.b16 %v119
    %v184 = vunpack.c.l.b16 %v120
    %v185 = vunpack.c.l.b16 %v121
    %v186 = vunpack.c.l.b16 %v122
    %v187 = vunpack.c.l.b16 %v123
    %v188 = vunpack.c.l.b16 %v124
    %v189 = vunpack.c.l.b16 %v125
    %v190 = vunpack.c.l.b16 %v126
    %v191 = vunpack.c.l.b16 %v127
    %v192 = vunpack.c.l.b16 %v128
    %v193 = vunpack.c.l.b16 %v129
    %v194 = vunpack.c.l.b16 %v130
    %v195 = vunpack.c.l.b16 %v131
    %v196 = vunpack.c.l.b16 %v132
    %v197 = vunpack.c.l.b16 %v133
    %v198 = vunpack.c.l.b16 %v134
    %v199 = vunpack.c.l.b16 %v135
    %v200 = vunpack.c.l.b16 %v136
    %v201 = vunpack.c.l.b16 %v137
    %v202 = vunpack.c.l.b16 %v138
    %v203 = vunpack.c.l.b16 %v139
    %v204 = vunpack.c.l.b16 %v140
    %v205 = vunpack.c.l.b16 %v141
    %v206 = vunpack.c.l.b16 %v142
    %v207 = vunpack.c.l.b16 %v143
    %v208 = vunpack.c.l.b16 %v144
    %v209 = vunpack.c.l.b16 %v145
    %v210 = vunpack.c.l.b16 %v146
    %v211 = vunpack.c.l.b16 %v147
    %v212 = vpack.c.b16 %v181, %v180
    %v213 = vpack.c.b16 %v183, %v182
    %v214 = vpack.c.b16 %v185, %v184
    %v215 = vpack.c.b16 %v187, %v186
    %v216 = vpack.c.b16 %v189, %v188
    %v217 = vpack.c.b16 %v191, %v190
    %v218 = vpack.c.b16 %v193, %v192
    %v219 = vpack.c.b16 %v195, %v194
    %v220 = vpack.c.b16 %v197, %v196
    %v221 = vpack.c.b16 %v199, %v198
    %v222 = vpack.c.b16 %v201, %v200
    %v223 = vpack.c.b16 %v203, %v202
    %v224 = vpack.c.b16 %v205, %v204
    %v225 = vpack.c.b16 %v207, %v206
    %v226 = vpack.c.b16 %v209, %v208
    %v227 = vpack.c.b16 %v211, %v210
    %244 = vmatprep.subr.bf16.mxu0 0
    %245 = vmatpush1.bf16.msra.mxu0 %v219
    %246 = vmatprep.subr.bf16.mxu0 0
    %247 = vmatpush1.bf16.msra.mxu0 %v218
    %248 = vmatprep.subr.bf16.mxu0 0
    %249 = vmatpush1.bf16.msra.mxu0 %v217
    %250 = vmatprep.subr.bf16.mxu0 0
    %251 = vmatpush1.bf16.msra.mxu0 %v216
    %252 = vmatprep.subr.bf16.mxu0 0
    %253 = vmatpush1.bf16.msra.mxu0 %v215
    %254 = vmatprep.subr.bf16.mxu0 0
    %255 = vmatpush1.bf16.msra.mxu0 %v214
    %256 = vmatprep.subr.bf16.mxu0 0
    %257 = vmatpush1.bf16.msra.mxu0 %v213
    %258 = vmatprep.subr.bf16.mxu0 0
    %259 = vmatpush1.bf16.msra.mxu0 %v212
    %260 = vmatprep.subr.bf16.mxu0 0
    %261 = vmatpush2.bf16.msra.mxu0 %v227
    %262 = vmatprep.subr.bf16.mxu0 0
    %263 = vmatpush2.bf16.msra.mxu0 %v226
    %264 = vmatprep.subr.bf16.mxu0 0
    %265 = vmatpush2.bf16.msra.mxu0 %v225
    %266 = vmatprep.subr.bf16.mxu0 0
    %267 = vmatpush2.bf16.msra.mxu0 %v224
    %268 = vmatprep.subr.bf16.mxu0 0
    %269 = vmatpush2.bf16.msra.mxu0 %v223
    %270 = vmatprep.subr.bf16.mxu0 0
    %271 = vmatpush2.bf16.msra.mxu0 %v222
    %272 = vmatprep.subr.bf16.mxu0 0
    %273 = vmatpush2.bf16.msra.mxu0 %v221
    %274 = vmatprep.subr.bf16.mxu0 0
    %275 = vmatpush2.bf16.msra.mxu0 %v220
    %276 = vmatprep.mubr.bf16.mxu0 %v115
    %277 = vmatmul.mubr.bf16.gmra.mxu0 %v114
    %v278 = vpop.f32.mrf.mxu0
    %v279 = vadd.f32 0.0, %v278
    %v280 = vpop.f32.mrf.mxu0
    %v281 = vpop.f32.mrf.mxu0
    %v282 = vpop.f32.mrf.mxu0
    %283 = vdwg.mxu0
    %v284 = vld [vmem:[#allocation5] sm:$0xff]
    %v285 = vld [vmem:[#allocation7] sm:$0xff]
    %v286 = vpack.c.bf16 %v279, %v279
    %v287 = vpack.c.bf16 %v284, %v284
    %v288 = vld [vmem:[#allocation8] sm:$0xff]
    %v289 = vld [vmem:[#allocation8 + $0x8] sm:$0xff]
    %v290 = vld [vmem:[#allocation8 + $0x10] sm:$0xff]
    %v291 = vld [vmem:[#allocation8 + $0x18] sm:$0xff]
    %v292 = vld [vmem:[#allocation8 + $0x20] sm:$0xff]
    %v293 = vld [vmem:[#allocation8 + $0x28] sm:$0xff]
    %v294 = vld [vmem:[#allocation8 + $0x30] sm:$0xff]
    %v295 = vld [vmem:[#allocation8 + $0x38] sm:$0xff]
    %v296 = vld [vmem:[#allocation8 + $0x40] sm:$0xff]
    %v297 = vld [vmem:[#allocation8 + $0x48] sm:$0xff]
    %v298 = vld [vmem:[#allocation8 + $0x50] sm:$0xff]
    %v299 = vld [vmem:[#allocation8 + $0x58] sm:$0xff]
    %v300 = vld [vmem:[#allocation8 + $0x60] sm:$0xff]
    %v301 = vld [vmem:[#allocation8 + $0x68] sm:$0xff]
    %v302 = vld [vmem:[#allocation8 + $0x70] sm:$0xff]
    %v303 = vld [vmem:[#allocation8 + $0x78] sm:$0xff]
    %v304 = vld [vmem:[#allocation8 + $0x80] sm:$0xff]
    %v305 = vld [vmem:[#allocation8 + $0x88] sm:$0xff]
    %v306 = vld [vmem:[#allocation8 + $0x90] sm:$0xff]
    %v307 = vld [vmem:[#allocation8 + $0x98] sm:$0xff]
    %v308 = vld [vmem:[#allocation8 + $0xa0] sm:$0xff]
    %v309 = vld [vmem:[#allocation8 + $0xa8] sm:$0xff]
    %v310 = vld [vmem:[#allocation8 + $0xb0] sm:$0xff]
    %v311 = vld [vmem:[#allocation8 + $0xb8] sm:$0xff]
    %v312 = vld [vmem:[#allocation8 + $0xc0] sm:$0xff]
    %v313 = vld [vmem:[#allocation8 + $0xc8] sm:$0xff]
    %v314 = vld [vmem:[#allocation8 + $0xd0] sm:$0xff]
    %v315 = vld [vmem:[#allocation8 + $0xd8] sm:$0xff]
    %v316 = vld [vmem:[#allocation8 + $0xe0] sm:$0xff]
    %v317 = vld [vmem:[#allocation8 + $0xe8] sm:$0xff]
    %v318 = vld [vmem:[#allocation8 + $0xf0] sm:$0xff]
    %v319 = vld [vmem:[#allocation8 + $0xf8] sm:$0xff]
    %v320 = vld [vmem:[#allocation8 + $0x100] sm:$0xff]
    %v321 = vld [vmem:[#allocation8 + $0x108] sm:$0xff]
    %v322 = vld [vmem:[#allocation8 + $0x110] sm:$0xff]
    %v323 = vld [vmem:[#allocation8 + $0x118] sm:$0xff]
    %v324 = vld [vmem:[#allocation8 + $0x120] sm:$0xff]
    %v325 = vld [vmem:[#allocation8 + $0x128] sm:$0xff]
    %v326 = vld [vmem:[#allocation8 + $0x130] sm:$0xff]
    %v327 = vld [vmem:[#allocation8 + $0x138] sm:$0xff]
    %v328 = vld [vmem:[#allocation8 + $0x140] sm:$0xff]
    %v329 = vld [vmem:[#allocation8 + $0x148] sm:$0xff]
    %v330 = vld [vmem:[#allocation8 + $0x150] sm:$0xff]
    %v331 = vld [vmem:[#allocation8 + $0x158] sm:$0xff]
    %v332 = vld [vmem:[#allocation8 + $0x160] sm:$0xff]
    %v333 = vld [vmem:[#allocation8 + $0x168] sm:$0xff]
    %v334 = vld [vmem:[#allocation8 + $0x170] sm:$0xff]
    %v335 = vld [vmem:[#allocation8 + $0x178] sm:$0xff]
    %v336 = vld [vmem:[#allocation8 + $0x180] sm:$0xff]
    %v337 = vld [vmem:[#allocation8 + $0x188] sm:$0xff]
    %v338 = vld [vmem:[#allocation8 + $0x190] sm:$0xff]
    %v339 = vld [vmem:[#allocation8 + $0x198] sm:$0xff]
    %v340 = vld [vmem:[#allocation8 + $0x1a0] sm:$0xff]
    %v341 = vld [vmem:[#allocation8 + $0x1a8] sm:$0xff]
    %v342 = vld [vmem:[#allocation8 + $0x1b0] sm:$0xff]
    %v343 = vld [vmem:[#allocation8 + $0x1b8] sm:$0xff]
    %v344 = vld [vmem:[#allocation8 + $0x1c0] sm:$0xff]
    %v345 = vld [vmem:[#allocation8 + $0x1c8] sm:$0xff]
    %v346 = vld [vmem:[#allocation8 + $0x1d0] sm:$0xff]
    %v347 = vld [vmem:[#allocation8 + $0x1d8] sm:$0xff]
    %v348 = vld [vmem:[#allocation8 + $0x1e0] sm:$0xff]
    %v349 = vld [vmem:[#allocation8 + $0x1e8] sm:$0xff]
    %v350 = vld [vmem:[#allocation8 + $0x1f0] sm:$0xff]
    %v351 = vld [vmem:[#allocation8 + $0x1f8] sm:$0xff]
    %v352 = vld [vmem:[%s5] sm:$0xf]
    %v354 = vlaneseq
    %v355 = vshrl.u32 %v354, 7
    %v356 = vsub.s32 0, %v355
    %v357 = vrot.slane %v352, %v356
    %v358 = vlaneseq
    %v359 = vshrl.u32 %v358, 7
    %v360 = vsub.s32 1, %v359
    %v361 = vrot.slane %v352, %v360
    %v362 = vlaneseq
    %v363 = vshrl.u32 %v362, 7
    %v364 = vsub.s32 2, %v363
    %v365 = vrot.slane %v352, %v364
    %v366 = vlaneseq
    %v367 = vshrl.u32 %v366, 7
    %v368 = vsub.s32 3, %v367
    %v369 = vrot.slane %v352, %v368
    %v438 = vunpack.c.l.b16 %v288
    %v439 = vunpack.c.h.b16 %v288
    %v440 = vunpack.c.l.b16 %v289
    %v441 = vunpack.c.h.b16 %v289
    %v442 = vunpack.c.l.b16 %v290
    %v443 = vunpack.c.h.b16 %v290
    %v444 = vunpack.c.l.b16 %v291
    %v445 = vunpack.c.h.b16 %v291
    %v446 = vunpack.c.l.b16 %v292
    %v447 = vunpack.c.h.b16 %v292
    %v448 = vunpack.c.l.b16 %v293
    %v449 = vunpack.c.h.b16 %v293
    %v450 = vunpack.c.l.b16 %v294
    %v451 = vunpack.c.h.b16 %v294
    %v452 = vunpack.c.l.b16 %v295
    %v453 = vunpack.c.h.b16 %v295
    %v454 = vunpack.c.l.b16 %v296
    %v455 = vunpack.c.h.b16 %v296
    %v456 = vunpack.c.l.b16 %v297
    %v457 = vunpack.c.h.b16 %v297
    %v458 = vunpack.c.l.b16 %v298
    %v459 = vunpack.c.h.b16 %v298
    %v460 = vunpack.c.l.b16 %v299
    %v461 = vunpack.c.h.b16 %v299
    %v462 = vunpack.c.l.b16 %v300
    %v463 = vunpack.c.h.b16 %v300
    %v464 = vunpack.c.l.b16 %v301
    %v465 = vunpack.c.h.b16 %v301
    %v466 = vunpack.c.l.b16 %v302
    %v467 = vunpack.c.h.b16 %v302
    %v468 = vunpack.c.l.b16 %v303
    %v469 = vunpack.c.h.b16 %v303
    %v470 = vunpack.c.l.b16 %v304
    %v471 = vunpack.c.h.b16 %v304
    %v472 = vunpack.c.l.b16 %v305
    %v473 = vunpack.c.h.b16 %v305
    %v474 = vunpack.c.l.b16 %v306
    %v475 = vunpack.c.h.b16 %v306
    %v476 = vunpack.c.l.b16 %v307
    %v477 = vunpack.c.h.b16 %v307
    %v478 = vunpack.c.l.b16 %v308
    %v479 = vunpack.c.h.b16 %v308
    %v480 = vunpack.c.l.b16 %v309
    %v481 = vunpack.c.h.b16 %v309
    %v482 = vunpack.c.l.b16 %v310
    %v483 = vunpack.c.h.b16 %v310
    %v484 = vunpack.c.l.b16 %v311
    %v485 = vunpack.c.h.b16 %v311
    %v486 = vunpack.c.l.b16 %v312
    %v487 = vunpack.c.h.b16 %v312
    %v488 = vunpack.c.l.b16 %v313
    %v489 = vunpack.c.h.b16 %v313
    %v490 = vunpack.c.l.b16 %v314
    %v491 = vunpack.c.h.b16 %v314
    %v492 = vunpack.c.l.b16 %v315
    %v493 = vunpack.c.h.b16 %v315
    %v494 = vunpack.c.l.b16 %v316
    %v495 = vunpack.c.h.b16 %v316
    %v496 = vunpack.c.l.b16 %v317
    %v497 = vunpack.c.h.b16 %v317
    %v498 = vunpack.c.l.b16 %v318
    %v499 = vunpack.c.h.b16 %v318
    %v500 = vunpack.c.l.b16 %v319
    %v501 = vunpack.c.h.b16 %v319
    %v502 = vunpack.c.l.b16 %v320
    %v503 = vunpack.c.h.b16 %v320
    %v504 = vunpack.c.l.b16 %v321
    %v505 = vunpack.c.h.b16 %v321
    %v506 = vunpack.c.l.b16 %v322
    %v507 = vunpack.c.h.b16 %v322
    %v508 = vunpack.c.l.b16 %v323
    %v509 = vunpack.c.h.b16 %v323
    %v510 = vunpack.c.l.b16 %v324
    %v511 = vunpack.c.h.b16 %v324
    %v512 = vunpack.c.l.b16 %v325
    %v513 = vunpack.c.h.b16 %v325
    %v514 = vunpack.c.l.b16 %v326
    %v515 = vunpack.c.h.b16 %v326
    %v516 = vunpack.c.l.b16 %v327
    %v517 = vunpack.c.h.b16 %v327
    %v518 = vunpack.c.l.b16 %v328
    %v519 = vunpack.c.h.b16 %v328
    %v520 = vunpack.c.l.b16 %v329
    %v521 = vunpack.c.h.b16 %v329
    %v522 = vunpack.c.l.b16 %v330
    %v523 = vunpack.c.h.b16 %v330
    %v524 = vunpack.c.l.b16 %v331
    %v525 = vunpack.c.h.b16 %v331
    %v526 = vunpack.c.l.b16 %v332
    %v527 = vunpack.c.h.b16 %v332
    %v528 = vunpack.c.l.b16 %v333
    %v529 = vunpack.c.h.b16 %v333
    %v530 = vunpack.c.l.b16 %v334
    %v531 = vunpack.c.h.b16 %v334
    %v532 = vunpack.c.l.b16 %v335
    %v533 = vunpack.c.h.b16 %v335
    %v534 = vunpack.c.l.b16 %v336
    %v535 = vunpack.c.h.b16 %v336
    %v536 = vunpack.c.l.b16 %v337
    %v537 = vunpack.c.h.b16 %v337
    %v538 = vunpack.c.l.b16 %v338
    %v539 = vunpack.c.h.b16 %v338
    %v540 = vunpack.c.l.b16 %v339
    %v541 = vunpack.c.h.b16 %v339
    %v542 = vunpack.c.l.b16 %v340
    %v543 = vunpack.c.h.b16 %v340
    %v544 = vunpack.c.l.b16 %v341
    %v545 = vunpack.c.h.b16 %v341
    %v546 = vunpack.c.l.b16 %v342
    %v547 = vunpack.c.h.b16 %v342
    %v548 = vunpack.c.l.b16 %v343
    %v549 = vunpack.c.h.b16 %v343
    %v550 = vunpack.c.l.b16 %v344
    %v551 = vunpack.c.h.b16 %v344
    %v552 = vunpack.c.l.b16 %v345
    %v553 = vunpack.c.h.b16 %v345
    %v554 = vunpack.c.l.b16 %v346
    %v555 = vunpack.c.h.b16 %v346
    %v556 = vunpack.c.l.b16 %v347
    %v557 = vunpack.c.h.b16 %v347
    %v558 = vunpack.c.l.b16 %v348
    %v559 = vunpack.c.h.b16 %v348
    %v560 = vunpack.c.l.b16 %v349
    %v561 = vunpack.c.h.b16 %v349
    %v562 = vunpack.c.l.b16 %v350
    %v563 = vunpack.c.h.b16 %v350
    %v564 = vunpack.c.l.b16 %v351
    %v565 = vunpack.c.h.b16 %v351
    %v566 = vpack.c.b16 %v442, %v438
    %v567 = vpack.c.b16 %v443, %v439
    %v568 = vpack.c.b16 %v444, %v440
    %v569 = vpack.c.b16 %v445, %v441
    %v570 = vpack.c.b16 %v450, %v446
    %v571 = vpack.c.b16 %v451, %v447
    %v572 = vpack.c.b16 %v452, %v448
    %v573 = vpack.c.b16 %v453, %v449
    %v574 = vpack.c.b16 %v458, %v454
    %v575 = vpack.c.b16 %v459, %v455
    %v576 = vpack.c.b16 %v460, %v456
    %v577 = vpack.c.b16 %v461, %v457
    %v578 = vpack.c.b16 %v466, %v462
    %v579 = vpack.c.b16 %v467, %v463
    %v580 = vpack.c.b16 %v468, %v464
    %v581 = vpack.c.b16 %v469, %v465
    %v582 = vpack.c.b16 %v474, %v470
    %v583 = vpack.c.b16 %v475, %v471
    %v584 = vpack.c.b16 %v476, %v472
    %v585 = vpack.c.b16 %v477, %v473
    %v586 = vpack.c.b16 %v482, %v478
    %v587 = vpack.c.b16 %v483, %v479
    %v588 = vpack.c.b16 %v484, %v480
    %v589 = vpack.c.b16 %v485, %v481
    %v590 = vpack.c.b16 %v490, %v486
    %v591 = vpack.c.b16 %v491, %v487
    %v592 = vpack.c.b16 %v492, %v488
    %v593 = vpack.c.b16 %v493, %v489
    %v594 = vpack.c.b16 %v498, %v494
    %v595 = vpack.c.b16 %v499, %v495
    %v596 = vpack.c.b16 %v500, %v496
    %v597 = vpack.c.b16 %v501, %v497
    %v598 = vpack.c.b16 %v506, %v502
    %v599 = vpack.c.b16 %v507, %v503
    %v600 = vpack.c.b16 %v508, %v504
    %v601 = vpack.c.b16 %v509, %v505
    %v602 = vpack.c.b16 %v514, %v510
    %v603 = vpack.c.b16 %v515, %v511
    %v604 = vpack.c.b16 %v516, %v512
    %v605 = vpack.c.b16 %v517, %v513
    %v606 = vpack.c.b16 %v522, %v518
    %v607 = vpack.c.b16 %v523, %v519
    %v608 = vpack.c.b16 %v524, %v520
    %v609 = vpack.c.b16 %v525, %v521
    %v610 = vpack.c.b16 %v530, %v526
    %v611 = vpack.c.b16 %v531, %v527
    %v612 = vpack.c.b16 %v532, %v528
    %v613 = vpack.c.b16 %v533, %v529
    %v614 = vpack.c.b16 %v538, %v534
    %v615 = vpack.c.b16 %v539, %v535
    %v616 = vpack.c.b16 %v540, %v536
    %v617 = vpack.c.b16 %v541, %v537
    %v618 = vpack.c.b16 %v546, %v542
    %v619 = vpack.c.b16 %v547, %v543
    %v620 = vpack.c.b16 %v548, %v544
    %v621 = vpack.c.b16 %v549, %v545
    %v622 = vpack.c.b16 %v554, %v550
    %v623 = vpack.c.b16 %v555, %v551
    %v624 = vpack.c.b16 %v556, %v552
    %v625 = vpack.c.b16 %v557, %v553
    %v626 = vpack.c.b16 %v562, %v558
    %v627 = vpack.c.b16 %v563, %v559
    %v628 = vpack.c.b16 %v564, %v560
    %v629 = vpack.c.b16 %v565, %v561
    %694 = vmatprep.subr.bf16.mxu0 %v595
    %695 = vmatpush1.bf16.msra.mxu0 %v594
    %696 = vmatprep.subr.bf16.mxu0 %v591
    %697 = vmatpush1.bf16.msra.mxu0 %v590
    %698 = vmatprep.subr.bf16.mxu0 %v587
    %699 = vmatpush1.bf16.msra.mxu0 %v586
    %700 = vmatprep.subr.bf16.mxu0 %v583
    %701 = vmatpush1.bf16.msra.mxu0 %v582
    %702 = vmatprep.subr.bf16.mxu0 %v579
    %703 = vmatpush1.bf16.msra.mxu0 %v578
    %704 = vmatprep.subr.bf16.mxu0 %v575
    %705 = vmatpush1.bf16.msra.mxu0 %v574
    %706 = vmatprep.subr.bf16.mxu0 %v571
    %707 = vmatpush1.bf16.msra.mxu0 %v570
    %708 = vmatprep.subr.bf16.mxu0 %v567
    %709 = vmatpush1.bf16.msra.mxu0 %v566
    %710 = vmatprep.subr.bf16.mxu0 %v627
    %711 = vmatpush2.bf16.msra.mxu0 %v626
    %712 = vmatprep.subr.bf16.mxu0 %v623
    %713 = vmatpush2.bf16.msra.mxu0 %v622
    %714 = vmatprep.subr.bf16.mxu0 %v619
    %715 = vmatpush2.bf16.msra.mxu0 %v618
    %716 = vmatprep.subr.bf16.mxu0 %v615
    %717 = vmatpush2.bf16.msra.mxu0 %v614
    %718 = vmatprep.subr.bf16.mxu0 %v611
    %719 = vmatpush2.bf16.msra.mxu0 %v610
    %720 = vmatprep.subr.bf16.mxu0 %v607
    %721 = vmatpush2.bf16.msra.mxu0 %v606
    %722 = vmatprep.subr.bf16.mxu0 %v603
    %723 = vmatpush2.bf16.msra.mxu0 %v602
    %724 = vmatprep.subr.bf16.mxu0 %v599
    %725 = vmatpush2.bf16.msra.mxu0 %v598
    %726 = vmatprep.mubr.bf16.mxu0 %v287
    %727 = vmatmul.mubr.bf16.gmra.mxu0 %v286
    %v728 = vpop.f32.mrf.mxu0
    %v729 = vadd.f32 %v357, %v728
    %v730 = vpop.f32.mrf.mxu0
    %v731 = vadd.f32 %v361, %v730
    %v732 = vpop.f32.mrf.mxu0
    %v733 = vpop.f32.mrf.mxu0
    %734 = vdwg.mxu0
    %735 = vmatprep.subr.bf16.mxu0 %v597
    %736 = vmatpush1.bf16.msra.mxu0 %v596
    %737 = vmatprep.subr.bf16.mxu0 %v593
    %738 = vmatpush1.bf16.msra.mxu0 %v592
    %739 = vmatprep.subr.bf16.mxu0 %v589
    %740 = vmatpush1.bf16.msra.mxu0 %v588
    %741 = vmatprep.subr.bf16.mxu0 %v585
    %742 = vmatpush1.bf16.msra.mxu0 %v584
    %743 = vmatprep.subr.bf16.mxu0 %v581
    %744 = vmatpush1.bf16.msra.mxu0 %v580
    %745 = vmatprep.subr.bf16.mxu0 %v577
    %746 = vmatpush1.bf16.msra.mxu0 %v576
    %747 = vmatprep.subr.bf16.mxu0 %v573
    %748 = vmatpush1.bf16.msra.mxu0 %v572
    %749 = vmatprep.subr.bf16.mxu0 %v569
    %750 = vmatpush1.bf16.msra.mxu0 %v568
    %751 = vmatprep.subr.bf16.mxu0 %v629
    %752 = vmatpush2.bf16.msra.mxu0 %v628
    %753 = vmatprep.subr.bf16.mxu0 %v625
    %754 = vmatpush2.bf16.msra.mxu0 %v624
    %755 = vmatprep.subr.bf16.mxu0 %v621
    %756 = vmatpush2.bf16.msra.mxu0 %v620
    %757 = vmatprep.subr.bf16.mxu0 %v617
    %758 = vmatpush2.bf16.msra.mxu0 %v616
    %759 = vmatprep.subr.bf16.mxu0 %v613
    %760 = vmatpush2.bf16.msra.mxu0 %v612
    %761 = vmatprep.subr.bf16.mxu0 %v609
    %762 = vmatpush2.bf16.msra.mxu0 %v608
    %763 = vmatprep.subr.bf16.mxu0 %v605
    %764 = vmatpush2.bf16.msra.mxu0 %v604
    %765 = vmatprep.subr.bf16.mxu0 %v601
    %766 = vmatpush2.bf16.msra.mxu0 %v600
    %767 = vmatprep.mubr.bf16.mxu0 %v287
    %768 = vmatmul.mubr.bf16.gmra.mxu0 %v286
    %v769 = vpop.f32.mrf.mxu0
    %v770 = vadd.f32 %v365, %v769
    %v771 = vpop.f32.mrf.mxu0
    %v772 = vadd.f32 %v369, %v771
    %v773 = vpop.f32.mrf.mxu0
    %v774 = vpop.f32.mrf.mxu0
    %775 = vdwg.mxu0
    %v776 = vxor.u32 %v729, 2147483648
    %v777 = vmul.f32 %v776, 1.442695
    %v778 = vpow.pop %v777
    %v779 = vadd.f32 %v778, 1.0
    %v780 = vrcp.pop %v779
    %v781 = vmul.f32 1.0, %v780
    %v782 = vxor.u32 %v731, 2147483648
    %v783 = vmul.f32 %v782, 1.442695
    %v784 = vpow.pop %v783
    %v785 = vadd.f32 %v784, 1.0
    %v786 = vrcp.pop %v785
    %v787 = vmul.f32 1.0, %v786
    %v788 = vtanh.pop %v770
    %v789 = vxor.u32 %v772, 2147483648
    %v790 = vmul.f32 %v789, 1.442695
    %v791 = vpow.pop %v790
    %v792 = vadd.f32 %v791, 1.0
    %v793 = vrcp.pop %v792
    %v794 = vmul.f32 1.0, %v793
    %v795 = vmul.f32 %v787, %v285
    %v796 = vmul.f32 %v781, %v788
    %v797 = vadd.f32 %v795, %v796
    %v798 = vtanh.pop %v797
    %v799 = vmul.f32 %v794, %v798
    %800 = vst [vmem:[#allocation12] sm:$0xff] %v799
    %801 = vst [vmem:[#allocation14] sm:$0xff] %v797
    %s802 = scalar_lea.vmem [#allocation5], 8
    %v803 = vld [vmem:[%s802] sm:$0xff]
    %s804 = scalar_lea.vmem [#allocation7], 8
    %v805 = vld [vmem:[%s804] sm:$0xff]
    %v806 = vpack.c.bf16 %v799, %v799
    %v807 = vpack.c.bf16 %v803, %v803
    %s808 = scalar_lea.vmem [#allocation8], 512
    %v809 = vld [vmem:[%s808] sm:$0xff]
    %v810 = vld [vmem:[%s808 + $0x8] sm:$0xff]
    %v811 = vld [vmem:[%s808 + $0x10] sm:$0xff]
    %v812 = vld [vmem:[%s808 + $0x18] sm:$0xff]
    %v813 = vld [vmem:[%s808 + $0x20] sm:$0xff]
    %v814 = vld [vmem:[%s808 + $0x28] sm:$0xff]
    %v815 = vld [vmem:[%s808 + $0x30] sm:$0xff]
    %v816 = vld [vmem:[%s808 + $0x38] sm:$0xff]
    %v817 = vld [vmem:[%s808 + $0x40] sm:$0xff]
    %v818 = vld [vmem:[%s808 + $0x48] sm:$0xff]
    %v819 = vld [vmem:[%s808 + $0x50] sm:$0xff]
    %v820 = vld [vmem:[%s808 + $0x58] sm:$0xff]
    %v821 = vld [vmem:[%s808 + $0x60] sm:$0xff]
    %v822 = vld [vmem:[%s808 + $0x68] sm:$0xff]
    %v823 = vld [vmem:[%s808 + $0x70] sm:$0xff]
    %v824 = vld [vmem:[%s808 + $0x78] sm:$0xff]
    %v825 = vld [vmem:[%s808 + $0x80] sm:$0xff]
    %v826 = vld [vmem:[%s808 + $0x88] sm:$0xff]
    %v827 = vld [vmem:[%s808 + $0x90] sm:$0xff]
    %v828 = vld [vmem:[%s808 + $0x98] sm:$0xff]
    %v829 = vld [vmem:[%s808 + $0xa0] sm:$0xff]
    %v830 = vld [vmem:[%s808 + $0xa8] sm:$0xff]
    %v831 = vld [vmem:[%s808 + $0xb0] sm:$0xff]
    %v832 = vld [vmem:[%s808 + $0xb8] sm:$0xff]
    %v833 = vld [vmem:[%s808 + $0xc0] sm:$0xff]
    %v834 = vld [vmem:[%s808 + $0xc8] sm:$0xff]
    %v835 = vld [vmem:[%s808 + $0xd0] sm:$0xff]
    %v836 = vld [vmem:[%s808 + $0xd8] sm:$0xff]
    %v837 = vld [vmem:[%s808 + $0xe0] sm:$0xff]
    %v838 = vld [vmem:[%s808 + $0xe8] sm:$0xff]
    %v839 = vld [vmem:[%s808 + $0xf0] sm:$0xff]
    %v840 = vld [vmem:[%s808 + $0xf8] sm:$0xff]
    %v841 = vld [vmem:[%s808 + $0x100] sm:$0xff]
    %v842 = vld [vmem:[%s808 + $0x108] sm:$0xff]
    %v843 = vld [vmem:[%s808 + $0x110] sm:$0xff]
    %v844 = vld [vmem:[%s808 + $0x118] sm:$0xff]
    %v845 = vld [vmem:[%s808 + $0x120] sm:$0xff]
    %v846 = vld [vmem:[%s808 + $0x128] sm:$0xff]
    %v847 = vld [vmem:[%s808 + $0x130] sm:$0xff]
    %v848 = vld [vmem:[%s808 + $0x138] sm:$0xff]
    %v849 = vld [vmem:[%s808 + $0x140] sm:$0xff]
    %v850 = vld [vmem:[%s808 + $0x148] sm:$0xff]
    %v851 = vld [vmem:[%s808 + $0x150] sm:$0xff]
    %v852 = vld [vmem:[%s808 + $0x158] sm:$0xff]
    %v853 = vld [vmem:[%s808 + $0x160] sm:$0xff]
    %v854 = vld [vmem:[%s808 + $0x168] sm:$0xff]
    %v855 = vld [vmem:[%s808 + $0x170] sm:$0xff]
    %v856 = vld [vmem:[%s808 + $0x178] sm:$0xff]
    %v857 = vld [vmem:[%s808 + $0x180] sm:$0xff]
    %v858 = vld [vmem:[%s808 + $0x188] sm:$0xff]
    %v859 = vld [vmem:[%s808 + $0x190] sm:$0xff]
    %v860 = vld [vmem:[%s808 + $0x198] sm:$0xff]
    %v861 = vld [vmem:[%s808 + $0x1a0] sm:$0xff]
    %v862 = vld [vmem:[%s808 + $0x1a8] sm:$0xff]
    %v863 = vld [vmem:[%s808 + $0x1b0] sm:$0xff]
    %v864 = vld [vmem:[%s808 + $0x1b8] sm:$0xff]
    %v865 = vld [vmem:[%s808 + $0x1c0] sm:$0xff]
    %v866 = vld [vmem:[%s808 + $0x1c8] sm:$0xff]
    %v867 = vld [vmem:[%s808 + $0x1d0] sm:$0xff]
    %v868 = vld [vmem:[%s808 + $0x1d8] sm:$0xff]
    %v869 = vld [vmem:[%s808 + $0x1e0] sm:$0xff]
    %v870 = vld [vmem:[%s808 + $0x1e8] sm:$0xff]
    %v871 = vld [vmem:[%s808 + $0x1f0] sm:$0xff]
    %v872 = vld [vmem:[%s808 + $0x1f8] sm:$0xff]
    %s873 = scalar_lea.vmem %s5, 4
    %v874 = vld [vmem:[%s873] sm:$0xf]
    %v876 = vlaneseq
    %v877 = vshrl.u32 %v876, 7
    %v878 = vsub.s32 0, %v877
    %v879 = vrot.slane %v874, %v878
    %v880 = vlaneseq
    %v881 = vshrl.u32 %v880, 7
    %v882 = vsub.s32 1, %v881
    %v883 = vrot.slane %v874, %v882
    %v884 = vlaneseq
    %v885 = vshrl.u32 %v884, 7
    %v886 = vsub.s32 2, %v885
    %v887 = vrot.slane %v874, %v886
    %v888 = vlaneseq
    %v889 = vshrl.u32 %v888, 7
    %v890 = vsub.s32 3, %v889
    %v891 = vrot.slane %v874, %v890
    %v960 = vunpack.c.l.b16 %v809
    %v961 = vunpack.c.h.b16 %v809
    %v962 = vunpack.c.l.b16 %v810
    %v963 = vunpack.c.h.b16 %v810
    %v964 = vunpack.c.l.b16 %v811
    %v965 = vunpack.c.h.b16 %v811
    %v966 = vunpack.c.l.b16 %v812
    %v967 = vunpack.c.h.b16 %v812
    %v968 = vunpack.c.l.b16 %v813
    %v969 = vunpack.c.h.b16 %v813
    %v970 = vunpack.c.l.b16 %v814
    %v971 = vunpack.c.h.b16 %v814
    %v972 = vunpack.c.l.b16 %v815
    %v973 = vunpack.c.h.b16 %v815
    %v974 = vunpack.c.l.b16 %v816
    %v975 = vunpack.c.h.b16 %v816
    %v976 = vunpack.c.l.b16 %v817
    %v977 = vunpack.c.h.b16 %v817
    %v978 = vunpack.c.l.b16 %v818
    %v979 = vunpack.c.h.b16 %v818
    %v980 = vunpack.c.l.b16 %v819
    %v981 = vunpack.c.h.b16 %v819
    %v982 = vunpack.c.l.b16 %v820
    %v983 = vunpack.c.h.b16 %v820
    %v984 = vunpack.c.l.b16 %v821
    %v985 = vunpack.c.h.b16 %v821
    %v986 = vunpack.c.l.b16 %v822
    %v987 = vunpack.c.h.b16 %v822
    %v988 = vunpack.c.l.b16 %v823
    %v989 = vunpack.c.h.b16 %v823
    %v990 = vunpack.c.l.b16 %v824
    %v991 = vunpack.c.h.b16 %v824
    %v992 = vunpack.c.l.b16 %v825
    %v993 = vunpack.c.h.b16 %v825
    %v994 = vunpack.c.l.b16 %v826
    %v995 = vunpack.c.h.b16 %v826
    %v996 = vunpack.c.l.b16 %v827
    %v997 = vunpack.c.h.b16 %v827
    %v998 = vunpack.c.l.b16 %v828
    %v999 = vunpack.c.h.b16 %v828
    %v1000 = vunpack.c.l.b16 %v829
    %v1001 = vunpack.c.h.b16 %v829
    %v1002 = vunpack.c.l.b16 %v830
    %v1003 = vunpack.c.h.b16 %v830
    %v1004 = vunpack.c.l.b16 %v831
    %v1005 = vunpack.c.h.b16 %v831
    %v1006 = vunpack.c.l.b16 %v832
    %v1007 = vunpack.c.h.b16 %v832
    %v1008 = vunpack.c.l.b16 %v833
    %v1009 = vunpack.c.h.b16 %v833
    %v1010 = vunpack.c.l.b16 %v834
    %v1011 = vunpack.c.h.b16 %v834
    %v1012 = vunpack.c.l.b16 %v835
    %v1013 = vunpack.c.h.b16 %v835
    %v1014 = vunpack.c.l.b16 %v836
    %v1015 = vunpack.c.h.b16 %v836
    %v1016 = vunpack.c.l.b16 %v837
    %v1017 = vunpack.c.h.b16 %v837
    %v1018 = vunpack.c.l.b16 %v838
    %v1019 = vunpack.c.h.b16 %v838
    %v1020 = vunpack.c.l.b16 %v839
    %v1021 = vunpack.c.h.b16 %v839
    %v1022 = vunpack.c.l.b16 %v840
    %v1023 = vunpack.c.h.b16 %v840
    %v1024 = vunpack.c.l.b16 %v841
    %v1025 = vunpack.c.h.b16 %v841
    %v1026 = vunpack.c.l.b16 %v842
    %v1027 = vunpack.c.h.b16 %v842
    %v1028 = vunpack.c.l.b16 %v843
    %v1029 = vunpack.c.h.b16 %v843
    %v1030 = vunpack.c.l.b16 %v844
    %v1031 = vunpack.c.h.b16 %v844
    %v1032 = vunpack.c.l.b16 %v845
    %v1033 = vunpack.c.h.b16 %v845
    %v1034 = vunpack.c.l.b16 %v846
    %v1035 = vunpack.c.h.b16 %v846
    %v1036 = vunpack.c.l.b16 %v847
    %v1037 = vunpack.c.h.b16 %v847
    %v1038 = vunpack.c.l.b16 %v848
    %v1039 = vunpack.c.h.b16 %v848
    %v1040 = vunpack.c.l.b16 %v849
    %v1041 = vunpack.c.h.b16 %v849
    %v1042 = vunpack.c.l.b16 %v850
    %v1043 = vunpack.c.h.b16 %v850
    %v1044 = vunpack.c.l.b16 %v851
    %v1045 = vunpack.c.h.b16 %v851
    %v1046 = vunpack.c.l.b16 %v852
    %v1047 = vunpack.c.h.b16 %v852
    %v1048 = vunpack.c.l.b16 %v853
    %v1049 = vunpack.c.h.b16 %v853
    %v1050 = vunpack.c.l.b16 %v854
    %v1051 = vunpack.c.h.b16 %v854
    %v1052 = vunpack.c.l.b16 %v855
    %v1053 = vunpack.c.h.b16 %v855
    %v1054 = vunpack.c.l.b16 %v856
    %v1055 = vunpack.c.h.b16 %v856
    %v1056 = vunpack.c.l.b16 %v857
    %v1057 = vunpack.c.h.b16 %v857
    %v1058 = vunpack.c.l.b16 %v858
    %v1059 = vunpack.c.h.b16 %v858
    %v1060 = vunpack.c.l.b16 %v859
    %v1061 = vunpack.c.h.b16 %v859
    %v1062 = vunpack.c.l.b16 %v860
    %v1063 = vunpack.c.h.b16 %v860
    %v1064 = vunpack.c.l.b16 %v861
    %v1065 = vunpack.c.h.b16 %v861
    %v1066 = vunpack.c.l.b16 %v862
    %v1067 = vunpack.c.h.b16 %v862
    %v1068 = vunpack.c.l.b16 %v863
    %v1069 = vunpack.c.h.b16 %v863
    %v1070 = vunpack.c.l.b16 %v864
    %v1071 = vunpack.c.h.b16 %v864
    %v1072 = vunpack.c.l.b16 %v865
    %v1073 = vunpack.c.h.b16 %v865
    %v1074 = vunpack.c.l.b16 %v866
    %v1075 = vunpack.c.h.b16 %v866
    %v1076 = vunpack.c.l.b16 %v867
    %v1077 = vunpack.c.h.b16 %v867
    %v1078 = vunpack.c.l.b16 %v868
    %v1079 = vunpack.c.h.b16 %v868
    %v1080 = vunpack.c.l.b16 %v869
    %v1081 = vunpack.c.h.b16 %v869
    %v1082 = vunpack.c.l.b16 %v870
    %v1083 = vunpack.c.h.b16 %v870
    %v1084 = vunpack.c.l.b16 %v871
    %v1085 = vunpack.c.h.b16 %v871
    %v1086 = vunpack.c.l.b16 %v872
    %v1087 = vunpack.c.h.b16 %v872
    %v1088 = vpack.c.b16 %v964, %v960
    %v1089 = vpack.c.b16 %v965, %v961
    %v1090 = vpack.c.b16 %v966, %v962
    %v1091 = vpack.c.b16 %v967, %v963
    %v1092 = vpack.c.b16 %v972, %v968
    %v1093 = vpack.c.b16 %v973, %v969
    %v1094 = vpack.c.b16 %v974, %v970
    %v1095 = vpack.c.b16 %v975, %v971
    %v1096 = vpack.c.b16 %v980, %v976
    %v1097 = vpack.c.b16 %v981, %v977
    %v1098 = vpack.c.b16 %v982, %v978
    %v1099 = vpack.c.b16 %v983, %v979
    %v1100 = vpack.c.b16 %v988, %v984
    %v1101 = vpack.c.b16 %v989, %v985
    %v1102 = vpack.c.b16 %v990, %v986
    %v1103 = vpack.c.b16 %v991, %v987
    %v1104 = vpack.c.b16 %v996, %v992
    %v1105 = vpack.c.b16 %v997, %v993
    %v1106 = vpack.c.b16 %v998, %v994
    %v1107 = vpack.c.b16 %v999, %v995
    %v1108 = vpack.c.b16 %v1004, %v1000
    %v1109 = vpack.c.b16 %v1005, %v1001
    %v1110 = vpack.c.b16 %v1006, %v1002
    %v1111 = vpack.c.b16 %v1007, %v1003
    %v1112 = vpack.c.b16 %v1012, %v1008
    %v1113 = vpack.c.b16 %v1013, %v1009
    %v1114 = vpack.c.b16 %v1014, %v1010
    %v1115 = vpack.c.b16 %v1015, %v1011
    %v1116 = vpack.c.b16 %v1020, %v1016
    %v1117 = vpack.c.b16 %v1021, %v1017
    %v1118 = vpack.c.b16 %v1022, %v1018
    %v1119 = vpack.c.b16 %v1023, %v1019
    %v1120 = vpack.c.b16 %v1028, %v1024
    %v1121 = vpack.c.b16 %v1029, %v1025
    %v1122 = vpack.c.b16 %v1030, %v1026
    %v1123 = vpack.c.b16 %v1031, %v1027
    %v1124 = vpack.c.b16 %v1036, %v1032
    %v1125 = vpack.c.b16 %v1037, %v1033
    %v1126 = vpack.c.b16 %v1038, %v1034
    %v1127 = vpack.c.b16 %v1039, %v1035
    %v1128 = vpack.c.b16 %v1044, %v1040
    %v1129 = vpack.c.b16 %v1045, %v1041
    %v1130 = vpack.c.b16 %v1046, %v1042
    %v1131 = vpack.c.b16 %v1047, %v1043
    %v1132 = vpack.c.b16 %v1052, %v1048
    %v1133 = vpack.c.b16 %v1053, %v1049
    %v1134 = vpack.c.b16 %v1054, %v1050
    %v1135 = vpack.c.b16 %v1055, %v1051
    %v1136 = vpack.c.b16 %v1060, %v1056
    %v1137 = vpack.c.b16 %v1061, %v1057
    %v1138 = vpack.c.b16 %v1062, %v1058
    %v1139 = vpack.c.b16 %v1063, %v1059
    %v1140 = vpack.c.b16 %v1068, %v1064
    %v1141 = vpack.c.b16 %v1069, %v1065
    %v1142 = vpack.c.b16 %v1070, %v1066
    %v1143 = vpack.c.b16 %v1071, %v1067
    %v1144 = vpack.c.b16 %v1076, %v1072
    %v1145 = vpack.c.b16 %v1077, %v1073
    %v1146 = vpack.c.b16 %v1078, %v1074
    %v1147 = vpack.c.b16 %v1079, %v1075
    %v1148 = vpack.c.b16 %v1084, %v1080
    %v1149 = vpack.c.b16 %v1085, %v1081
    %v1150 = vpack.c.b16 %v1086, %v1082
    %v1151 = vpack.c.b16 %v1087, %v1083
    %1216 = vmatprep.subr.bf16.mxu0 %v1117
    %1217 = vmatpush1.bf16.msra.mxu0 %v1116
    %1218 = vmatprep.subr.bf16.mxu0 %v1113
    %1219 = vmatpush1.bf16.msra.mxu0 %v1112
    %1220 = vmatprep.subr.bf16.mxu0 %v1109
    %1221 = vmatpush1.bf16.msra.mxu0 %v1108
    %1222 = vmatprep.subr.bf16.mxu0 %v1105
    %1223 = vmatpush1.bf16.msra.mxu0 %v1104
    %1224 = vmatprep.subr.bf16.mxu0 %v1101
    %1225 = vmatpush1.bf16.msra.mxu0 %v1100
    %1226 = vmatprep.subr.bf16.mxu0 %v1097
    %1227 = vmatpush1.bf16.msra.mxu0 %v1096
    %1228 = vmatprep.subr.bf16.mxu0 %v1093
    %1229 = vmatpush1.bf16.msra.mxu0 %v1092
    %1230 = vmatprep.subr.bf16.mxu0 %v1089
    %1231 = vmatpush1.bf16.msra.mxu0 %v1088
    %1232 = vmatprep.subr.bf16.mxu0 %v1149
    %1233 = vmatpush2.bf16.msra.mxu0 %v1148
    %1234 = vmatprep.subr.bf16.mxu0 %v1145
    %1235 = vmatpush2.bf16.msra.mxu0 %v1144
    %1236 = vmatprep.subr.bf16.mxu0 %v1141
    %1237 = vmatpush2.bf16.msra.mxu0 %v1140
    %1238 = vmatprep.subr.bf16.mxu0 %v1137
    %1239 = vmatpush2.bf16.msra.mxu0 %v1136
    %1240 = vmatprep.subr.bf16.mxu0 %v1133
    %1241 = vmatpush2.bf16.msra.mxu0 %v1132
    %1242 = vmatprep.subr.bf16.mxu0 %v1129
    %1243 = vmatpush2.bf16.msra.mxu0 %v1128
    %1244 = vmatprep.subr.bf16.mxu0 %v1125
    %1245 = vmatpush2.bf16.msra.mxu0 %v1124
    %1246 = vmatprep.subr.bf16.mxu0 %v1121
    %1247 = vmatpush2.bf16.msra.mxu0 %v1120
    %1248 = vmatprep.mubr.bf16.mxu0 %v807
    %1249 = vmatmul.mubr.bf16.gmra.mxu0 %v806
    %v1250 = vpop.f32.mrf.mxu0
    %v1251 = vadd.f32 %v879, %v1250
    %v1252 = vpop.f32.mrf.mxu0
    %v1253 = vadd.f32 %v883, %v1252
    %v1254 = vpop.f32.mrf.mxu0
    %v1255 = vpop.f32.mrf.mxu0
    %1256 = vdwg.mxu0
    %1257 = vmatprep.subr.bf16.mxu0 %v1119
    %1258 = vmatpush1.bf16.msra.mxu0 %v1118
    %1259 = vmatprep.subr.bf16.mxu0 %v1115
    %1260 = vmatpush1.bf16.msra.mxu0 %v1114
    %1261 = vmatprep.subr.bf16.mxu0 %v1111
    %1262 = vmatpush1.bf16.msra.mxu0 %v1110
    %1263 = vmatprep.subr.bf16.mxu0 %v1107
    %1264 = vmatpush1.bf16.msra.mxu0 %v1106
    %1265 = vmatprep.subr.bf16.mxu0 %v1103
    %1266 = vmatpush1.bf16.msra.mxu0 %v1102
    %1267 = vmatprep.subr.bf16.mxu0 %v1099
    %1268 = vmatpush1.bf16.msra.mxu0 %v1098
    %1269 = vmatprep.subr.bf16.mxu0 %v1095
    %1270 = vmatpush1.bf16.msra.mxu0 %v1094
    %1271 = vmatprep.subr.bf16.mxu0 %v1091
    %1272 = vmatpush1.bf16.msra.mxu0 %v1090
    %1273 = vmatprep.subr.bf16.mxu0 %v1151
    %1274 = vmatpush2.bf16.msra.mxu0 %v1150
    %1275 = vmatprep.subr.bf16.mxu0 %v1147
    %1276 = vmatpush2.bf16.msra.mxu0 %v1146
    %1277 = vmatprep.subr.bf16.mxu0 %v1143
    %1278 = vmatpush2.bf16.msra.mxu0 %v1142
    %1279 = vmatprep.subr.bf16.mxu0 %v1139
    %1280 = vmatpush2.bf16.msra.mxu0 %v1138
    %1281 = vmatprep.subr.bf16.mxu0 %v1135
    %1282 = vmatpush2.bf16.msra.mxu0 %v1134
    %1283 = vmatprep.subr.bf16.mxu0 %v1131
    %1284 = vmatpush2.bf16.msra.mxu0 %v1130
    %1285 = vmatprep.subr.bf16.mxu0 %v1127
    %1286 = vmatpush2.bf16.msra.mxu0 %v1126
    %1287 = vmatprep.subr.bf16.mxu0 %v1123
    %1288 = vmatpush2.bf16.msra.mxu0 %v1122
    %1289 = vmatprep.mubr.bf16.mxu0 %v807
    %1290 = vmatmul.mubr.bf16.gmra.mxu0 %v806
    %v1291 = vpop.f32.mrf.mxu0
    %v1292 = vadd.f32 %v887, %v1291
    %v1293 = vpop.f32.mrf.mxu0
    %v1294 = vadd.f32 %v891, %v1293
    %v1295 = vpop.f32.mrf.mxu0
    %v1296 = vpop.f32.mrf.mxu0
    %1297 = vdwg.mxu0
    %v1298 = vxor.u32 %v1251, 2147483648
    %v1299 = vmul.f32 %v1298, 1.442695
    %v1300 = vpow.pop %v1299
    %v1301 = vadd.f32 %v1300, 1.0
    %v1302 = vrcp.pop %v1301
    %v1303 = vmul.f32 1.0, %v1302
    %v1304 = vxor.u32 %v1253, 2147483648
    %v1305 = vmul.f32 %v1304, 1.442695
    %v1306 = vpow.pop %v1305
    %v1307 = vadd.f32 %v1306, 1.0
    %v1308 = vrcp.pop %v1307
    %v1309 = vmul.f32 1.0, %v1308
    %v1310 = vtanh.pop %v1292
    %v1311 = vxor.u32 %v1294, 2147483648
    %v1312 = vmul.f32 %v1311, 1.442695
    %v1313 = vpow.pop %v1312
    %v1314 = vadd.f32 %v1313, 1.0
    %v1315 = vrcp.pop %v1314
    %v1316 = vmul.f32 1.0, %v1315
    %v1317 = vmul.f32 %v1309, %v805
    %v1318 = vmul.f32 %v1303, %v1310
    %v1319 = vadd.f32 %v1317, %v1318
    %v1320 = vtanh.pop %v1319
    %v1321 = vmul.f32 %v1316, %v1320
    %s1322 = scalar_lea.vmem [#allocation12], 8
    %1323 = vst [vmem:[%s1322] sm:$0xff] %v1321
    %s1324 = scalar_lea.vmem [#allocation14], 8
    %1325 = vst [vmem:[%s1324] sm:$0xff] %v1319
    %v1326 = vpack.c.bf16 %v1321, %v1321
    %v1327 = vld [vmem:[#allocation10] sm:$0xff]
    %v1328 = vld [vmem:[#allocation10 + $0x8] sm:$0xff]
    %v1329 = vld [vmem:[#allocation10 + $0x10] sm:$0xff]
    %v1330 = vld [vmem:[#allocation10 + $0x18] sm:$0xff]
    %v1331 = vld [vmem:[#allocation10 + $0x20] sm:$0xff]
    %v1332 = vld [vmem:[#allocation10 + $0x28] sm:$0xff]
    %v1333 = vld [vmem:[#allocation10 + $0x30] sm:$0xff]
    %v1334 = vld [vmem:[#allocation10 + $0x38] sm:$0xff]
    %v1335 = vld [vmem:[#allocation10 + $0x40] sm:$0xff]
    %v1336 = vld [vmem:[#allocation10 + $0x48] sm:$0xff]
    %v1337 = vld [vmem:[#allocation10 + $0x50] sm:$0xff]
    %v1338 = vld [vmem:[#allocation10 + $0x58] sm:$0xff]
    %v1339 = vld [vmem:[#allocation10 + $0x60] sm:$0xff]
    %v1340 = vld [vmem:[#allocation10 + $0x68] sm:$0xff]
    %v1341 = vld [vmem:[#allocation10 + $0x70] sm:$0xff]
    %v1342 = vld [vmem:[#allocation10 + $0x78] sm:$0xff]
    %v1343 = vld [vmem:[%s7] sm:$0x3]
    %v1345 = vlaneseq
    %v1346 = vshrl.u32 %v1345, 7
    %v1347 = vsub.s32 0, %v1346
    %v1348 = vrot.slane %v1343, %v1347
    %v1349 = vlaneseq
    %v1350 = vshrl.u32 %v1349, 7
    %v1351 = vsub.s32 1, %v1350
    %v1352 = vrot.slane %v1343, %v1351
    %v1371 = vunpack.c.l.b16 %v1327
    %v1372 = vunpack.c.h.b16 %v1327
    %v1373 = vunpack.c.l.b16 %v1328
    %v1374 = vunpack.c.h.b16 %v1328
    %v1375 = vunpack.c.l.b16 %v1329
    %v1376 = vunpack.c.h.b16 %v1329
    %v1377 = vunpack.c.l.b16 %v1330
    %v1378 = vunpack.c.h.b16 %v1330
    %v1379 = vunpack.c.l.b16 %v1331
    %v1380 = vunpack.c.h.b16 %v1331
    %v1381 = vunpack.c.l.b16 %v1332
    %v1382 = vunpack.c.h.b16 %v1332
    %v1383 = vunpack.c.l.b16 %v1333
    %v1384 = vunpack.c.h.b16 %v1333
    %v1385 = vunpack.c.l.b16 %v1334
    %v1386 = vunpack.c.h.b16 %v1334
    %v1387 = vunpack.c.l.b16 %v1335
    %v1388 = vunpack.c.h.b16 %v1335
    %v1389 = vunpack.c.l.b16 %v1336
    %v1390 = vunpack.c.h.b16 %v1336
    %v1391 = vunpack.c.l.b16 %v1337
    %v1392 = vunpack.c.h.b16 %v1337
    %v1393 = vunpack.c.l.b16 %v1338
    %v1394 = vunpack.c.h.b16 %v1338
    %v1395 = vunpack.c.l.b16 %v1339
    %v1396 = vunpack.c.h.b16 %v1339
    %v1397 = vunpack.c.l.b16 %v1340
    %v1398 = vunpack.c.h.b16 %v1340
    %v1399 = vunpack.c.l.b16 %v1341
    %v1400 = vunpack.c.h.b16 %v1341
    %v1401 = vunpack.c.l.b16 %v1342
    %v1402 = vunpack.c.h.b16 %v1342
    %v1403 = vpack.c.b16 %v1373, %v1371
    %v1404 = vpack.c.b16 %v1374, %v1372
    %v1405 = vpack.c.b16 %v1377, %v1375
    %v1406 = vpack.c.b16 %v1378, %v1376
    %v1407 = vpack.c.b16 %v1381, %v1379
    %v1408 = vpack.c.b16 %v1382, %v1380
    %v1409 = vpack.c.b16 %v1385, %v1383
    %v1410 = vpack.c.b16 %v1386, %v1384
    %v1411 = vpack.c.b16 %v1389, %v1387
    %v1412 = vpack.c.b16 %v1390, %v1388
    %v1413 = vpack.c.b16 %v1393, %v1391
    %v1414 = vpack.c.b16 %v1394, %v1392
    %v1415 = vpack.c.b16 %v1397, %v1395
    %v1416 = vpack.c.b16 %v1398, %v1396
    %v1417 = vpack.c.b16 %v1401, %v1399
    %v1418 = vpack.c.b16 %v1402, %v1400
    %1435 = vmatprep.subr.bf16.mxu0 %v1418
    %1436 = vmatpush1.bf16.msra.mxu0 %v1417
    %1437 = vmatprep.subr.bf16.mxu0 %v1416
    %1438 = vmatpush1.bf16.msra.mxu0 %v1415
    %1439 = vmatprep.subr.bf16.mxu0 %v1414
    %1440 = vmatpush1.bf16.msra.mxu0 %v1413
    %1441 = vmatprep.subr.bf16.mxu0 %v1412
    %1442 = vmatpush1.bf16.msra.mxu0 %v1411
    %1443 = vmatprep.subr.bf16.mxu0 %v1410
    %1444 = vmatpush1.bf16.msra.mxu0 %v1409
    %1445 = vmatprep.subr.bf16.mxu0 %v1408
    %1446 = vmatpush1.bf16.msra.mxu0 %v1407
    %1447 = vmatprep.subr.bf16.mxu0 %v1406
    %1448 = vmatpush1.bf16.msra.mxu0 %v1405
    %1449 = vmatprep.subr.bf16.mxu0 %v1404
    %1450 = vmatpush1.bf16.msra.mxu0 %v1403
    %1451 = vmatprep.subr.bf16.mxu0 0
    %1452 = vmatpush2.bf16.msra.mxu0 0
    %1453 = vmatprep.subr.bf16.mxu0 0
    %1454 = vmatpush2.bf16.msra.mxu0 0
    %1455 = vmatprep.subr.bf16.mxu0 0
    %1456 = vmatpush2.bf16.msra.mxu0 0
    %1457 = vmatprep.subr.bf16.mxu0 0
    %1458 = vmatpush2.bf16.msra.mxu0 0
    %1459 = vmatprep.subr.bf16.mxu0 0
    %1460 = vmatpush2.bf16.msra.mxu0 0
    %1461 = vmatprep.subr.bf16.mxu0 0
    %1462 = vmatpush2.bf16.msra.mxu0 0
    %1463 = vmatprep.subr.bf16.mxu0 0
    %1464 = vmatpush2.bf16.msra.mxu0 0
    %1465 = vmatprep.subr.bf16.mxu0 0
    %1466 = vmatpush2.bf16.msra.mxu0 0
    %1467 = vmatprep.mubr.bf16.mxu0 0
    %1468 = vmatmul.mubr.bf16.gmra.mxu0 %v1326
    %v1469 = vpop.f32.mrf.mxu0
    %v1470 = vadd.f32 %v1348, %v1469
    %v1471 = vpop.f32.mrf.mxu0
    %v1472 = vadd.f32 %v1352, %v1471
    %v1473 = vpop.f32.mrf.mxu0
    %v1474 = vpop.f32.mrf.mxu0
    %1475 = vdwg.mxu0
    %1476 = vst [vmem:[#allocation11] sm:$0xff] %v1470
    %1477 = vst [vmem:[#allocation11 + $0x8] sm:$0xff] %v1472
    // Predicated region
    $region54: #{decoder_forward.1} parent=1 // pred_check
      _
    $region55: #{decoder_forward.1} parent=1 // pred_check_branch
      %1479 = sbr.rel (0) target = $region57
    $region56: #{decoder_forward.1} parent=1 // pred_region
      %s1481 = ssub.s32 256, 256
      %1482 = vsyncadd [#allocation4], %s1481
      %s1484 = sshll.u32 [#allocation11], 4
      %s1485 = int_to_ptr.vmem [resolvable:$true] %s1484
      %1487 = dma.vmem_to_hbm [thread:$0]  %s1485, 256, %s8, [#allocation4]
    $region57: #{decoder_forward.1} parent=1 // pred_fallthru
      _
    // Predicated region
    $region58: #{decoder_forward.1} parent=1 // pred_check
      _
    $region59: #{decoder_forward.1} parent=1 // pred_check_branch
      %1489 = sbr.rel (0) target = $region61
    $region60: #{decoder_forward.1} parent=1 // pred_region
      %s1491 = ssub.s32 256, 256
      %1492 = vsyncadd [#allocation13], %s1491
      %s1493 = sshll.u32 [#allocation12], 4
      %s1494 = int_to_ptr.vmem [resolvable:$true] %s1493
      %1499 = dma.vmem_to_hbm [thread:$0]  %s1494, 256, %s9, [#allocation13], 128, 128, 8
    $region61: #{decoder_forward.1} parent=1 // pred_fallthru
      _
    // Predicated region
    $region62: #{decoder_forward.1} parent=1 // pred_check
      _
    $region63: #{decoder_forward.1} parent=1 // pred_check_branch
      %1501 = sbr.rel (0) target = $region65
    $region64: #{decoder_forward.1} parent=1 // pred_region
      %s1503 = ssub.s32 256, 256
      %1504 = vsyncadd [#allocation13], %s1503
      %s1505 = sshll.u32 [#allocation14], 4
      %s1506 = int_to_ptr.vmem [resolvable:$true] %s1505
      %1511 = dma.vmem_to_hbm [thread:$0]  %s1506, 256, %s10, [#allocation13], 128, 128, 8
    $region65: #{decoder_forward.1} parent=1 // pred_fallthru
      _
    // Predicated region
    $region66: #{decoder_forward.1} parent=1 // pred_check
      _
    $region67: #{decoder_forward.1} parent=1 // pred_check_branch
      %1513 = sbr.rel (0) target = $region69
    $region68: #{decoder_forward.1} parent=1 // pred_region
      %1514 = dma.done [#allocation4], 256
    $region69: #{decoder_forward.1} parent=1 // pred_fallthru
      _
    // Predicated region
    $region70: #{decoder_forward.1} parent=1 // pred_check
      _
    $region71: #{decoder_forward.1} parent=1 // pred_check_branch
      %1516 = sbr.rel (0) target = $region73
    $region72: #{decoder_forward.1} parent=1 // pred_region
      %1517 = dma.done [#allocation13], 256
    $region73: #{decoder_forward.1} parent=1 // pred_fallthru
      _
    // Predicated region
    $region74: #{decoder_forward.1} parent=1 // pred_check
      _
    $region75: #{decoder_forward.1} parent=1 // pred_check_branch
      %1519 = sbr.rel (0) target = $region77
    $region76: #{decoder_forward.1} parent=1 // pred_region
      %1520 = dma.done [#allocation13], 256
    $region77: #{decoder_forward.1} parent=1 // pred_fallthru
      _
    %1521 = vsyncpa [#allocation3], 1
    %1522 = vsyncpa [#allocation6], 1
    %1523 = vsyncpa [#allocation9], 1
    %1524 = vsyncpa [#allocation4], 1
    %1525 = vsyncpa [#allocation13], 1

</llo_original>
